<compile_context>
chip_gen: v7x
topology: tpu7x:2x2x1
jax: 0.10.0
libtpu: 0.0.40
codegen_flags: <defaults>
</compile_context>

<pallas_src>
import jax
import jax.numpy as jnp
from jax import lax
from jax.experimental import pallas as pl
from jax.experimental.pallas import tpu as pltpu

FEAT_CHANNELS = 64
NUM_CLASSES = 5
DUAL_HEAD = True


def _round_up(x, m):
    return ((x + m - 1) // m) * m


def _vmem_limit_bytes(block_bytes, floor=32 << 20, headroom=1.5):
    """Scoped-VMEM limit computed from actual block sizes (never below default)."""
    return int(max(sum(block_bytes) * headroom, floor))


# ---------------------------------------------------------------------------
# Backbone stand-in: fused 3x3 conv (pad=1) + bias + ReLU.
# 9 taps -> 9 large-M MXU dots per tile, one f32 accumulator, one store.
# ---------------------------------------------------------------------------
def _conv_kernel(xp_ref, w_ref, b_ref, o_ref):
    # xp_ref: (1, Hp+2, W+2, Cin) f32  padded image, resident across the row-tile axis
    # w_ref : (3, 3, Cin, Cout)   bf16 tap weights
    # b_ref : (1, Cout)           f32
    # o_ref : (1, tile_h, W, Cout) f32
    tile_h, W, Cout = o_ref.shape[1], o_ref.shape[2], o_ref.shape[3]
    Cin = xp_ref.shape[3]
    row0 = pl.program_id(1) * tile_h

    acc = jnp.zeros((tile_h * W, Cout), jnp.float32)
    for kh in range(3):
        for kw in range(3):
            a = xp_ref[0, pl.ds(row0 + kh, tile_h), pl.ds(kw, W), :]   # (tile_h, W, Cin)
            a = a.reshape(tile_h * W, Cin).astype(jnp.bfloat16)        # M = tile_h*W
            acc = acc + jnp.dot(a, w_ref[kh, kw],
                                preferred_element_type=jnp.float32)
    out = jnp.maximum(acc + b_ref[...], 0.0)                # bias + ReLU in f32 (v5e)
    o_ref[...] = out.reshape(1, tile_h, W, Cout)            # single unmasked store


def conv3x3_relu_pallas(x_nhwc, w_hwio, b, *, tile_h=8):
    """3x3 'SAME' conv + bias + ReLU. x:(N,H,W,Cin) f32, w:(3,3,Cin,Cout), b:(Cout,)."""
    N, H, W, Cin = x_nhwc.shape
    Cout = w_hwio.shape[-1]
    tile_h = max(1, min(tile_h, H))
    Hp = _round_up(H, tile_h)                 # pad H instead of the tile_h=H fallback

    # halo of 1 on all sides + (Hp - H) extra bottom rows (results sliced off later)
    xp = jnp.pad(x_nhwc, ((0, 0), (1, 1 + Hp - H), (1, 1), (0, 0)))
    w_bf16 = w_hwio.astype(jnp.bfloat16)
    b2 = b.reshape(1, Cout).astype(jnp.float32)

    xp_block = (Hp + 2) * (W + 2) * Cin * 4
    out_block = tile_h * W * Cout * 4
    vmem_limit = _vmem_limit_bytes(
        [2 * xp_block, 2 * out_block, 2 * w_bf16.size * 2, 2 * Cout * 4])
    # TODO(synk): size-gate xp_block against v7x's 64 MiB VMEM and fall back to halo
    # row-tiling with an interleaved (W+2)*Cin minor layout for production images.

    cost = pl.CostEstimate(
        flops=2 * N * Hp * W * 9 * Cin * Cout,
        transcendentals=0,
        bytes_accessed=xp.size * 4 + N * Hp * W * Cout * 4 + w_bf16.size * 2 + Cout * 4)

    out = pl.pallas_call(
        _conv_kernel,
        out_shape=jax.ShapeDtypeStruct((N, Hp, W, Cout), jnp.float32),
        grid_spec=pltpu.PrefetchScalarGridSpec(
            num_scalar_prefetch=0,
            grid=(N, Hp // tile_h),
            in_specs=[
                # same block index across r => padded image fetched once per n
                pl.BlockSpec((1, Hp + 2, W + 2, Cin), lambda n, r: (n, 0, 0, 0)),
                pl.BlockSpec((3, 3, Cin, Cout), lambda n, r: (0, 0, 0, 0)),
                pl.BlockSpec((1, Cout), lambda n, r: (0, 0)),
            ],
            out_specs=pl.BlockSpec((1, tile_h, W, Cout), lambda n, r: (n, r, 0, 0)),
        ),
        compiler_params=pltpu.CompilerParams(
            dimension_semantics=("parallel", "parallel"),   # disjoint output blocks
            vmem_limit_bytes=vmem_limit),
        cost_estimate=cost,
    )(xp, w_bf16, b2)
    return out[:, :H]                                       # drop padded rows


# ---------------------------------------------------------------------------
# Gather at img_indices + fused dual linear heads, tiled over P.
# ---------------------------------------------------------------------------
def _head_kernel(idx_ref, feat_ref, w_ref, b_ref, feats_ref, logits_ref, gbuf_ref):
    # idx_ref  : (P_pad,) int32 in SMEM (scalar prefetch) -- flat row ids
    # feat_ref : (R, C) f32   whole feature map (grid-invariant block)
    # w_ref    : (C, LP) bf16 fused [lin1 | lin2 | zero-pad], lane-dense LP
    # b_ref    : (1, LP) f32
    # feats_ref: (tile_p, C) f32 ; logits_ref: (tile_p, LP) f32
    # gbuf_ref : (tile_p, C) f32 VMEM scratch for the gathered rows
    tile_p = feats_ref.shape[0]
    base = pl.program_id(0) * tile_p

    def gather8(g, carry):                    # unroll-by-8 row gather into scratch
        p0 = pl.multiple_of(g * 8, 8)
        for j in range(8):
            row = idx_ref[base + p0 + j]
            gbuf_ref[pl.ds(p0 + j, 1), :] = feat_ref[pl.ds(row, 1), :]
        return carry

    lax.fori_loop(0, tile_p // 8, gather8, 0)
    # TODO(synk): for large R (v7x) switch to an async-DMA row gather from HBM
    # (feat in memory_space=pl.ANY) overlapped with the previous tile's matmul.

    f = gbuf_ref[...]
    feats_ref[...] = f                                       # one whole-block store
    logits_ref[...] = (jnp.dot(f.astype(jnp.bfloat16), w_ref[...],
                               preferred_element_type=jnp.float32)
                       + b_ref[...])


def head_pallas(feat_flat, idx_pad, w_cat, b_cat, *, tile_p):
    R, C = feat_flat.shape
    P_pad = idx_pad.shape[0]
    LP = w_cat.shape[1]
    assert tile_p % 8 == 0 and P_pad % tile_p == 0

    vmem_limit = _vmem_limit_bytes(
        [2 * R * C * 4, 2 * C * LP * 2, 2 * LP * 4,
         2 * tile_p * C * 4, 2 * tile_p * LP * 4, tile_p * C * 4])

    cost = pl.CostEstimate(
        flops=2 * P_pad * C * LP,
        transcendentals=0,
        bytes_accessed=R * C * 4 + P_pad * (C + LP) * 4 + C * LP * 2 + LP * 4 + P_pad * 4)

    out_shapes = (
        jax.ShapeDtypeStruct((P_pad, C), jnp.float32),    # gathered feats
        jax.ShapeDtypeStruct((P_pad, LP), jnp.float32),   # fused lane-dense logits
    )
    return pl.pallas_call(
        _head_kernel,
        out_shape=out_shapes,
        grid_spec=pltpu.PrefetchScalarGridSpec(
            num_scalar_prefetch=1,
            grid=(P_pad // tile_p,),
            in_specs=[
                pl.BlockSpec((R, C), lambda i, idx: (0, 0)),
                pl.BlockSpec((C, LP), lambda i, idx: (0, 0)),
                pl.BlockSpec((1, LP), lambda i, idx: (0, 0)),
            ],
            out_specs=(
                pl.BlockSpec((tile_p, C), lambda i, idx: (i, 0)),
                pl.BlockSpec((tile_p, LP), lambda i, idx: (i, 0)),
            ),
            scratch_shapes=[pltpu.VMEM((tile_p, C), jnp.float32)],
        ),
        compiler_params=pltpu.CompilerParams(
            dimension_semantics=("parallel",),
            vmem_limit_bytes=vmem_limit),
        cost_estimate=cost,
    )(idx_pad, feat_flat, w_cat, b_cat)


# ---------------------------------------------------------------------------
# Net2DSeg forward (wrapper = glue around the two Pallas kernels)
# ---------------------------------------------------------------------------
def net2dseg_forward(params, data_batch, *, tile_h=8, tile_p=512):
    img = data_batch["img"]                  # (N, 3, H, W), NCHW like PyTorch
    img_indices = data_batch["img_indices"]  # list of (P_i, 2) int32 (row, col)

    x_nhwc = jnp.transpose(img, (0, 2, 3, 1)).astype(jnp.float32)   # NCHW -> NHWC
    feat = conv3x3_relu_pallas(x_nhwc, params["conv_w"], params["conv_b"],
                               tile_h=tile_h)
    N, H, W, C = feat.shape
    R = N * H * W

    # Flatten per-image (row, col) gather into flat row ids of (N*H*W, C).
    flat_idx = jnp.concatenate(
        [i * H * W + img_indices[i][:, 0] * W + img_indices[i][:, 1]
         for i in range(N)], axis=0).astype(jnp.int32)
    flat_idx = jnp.clip(flat_idx, 0, R - 1)            # no silent OOB in-kernel
    P = flat_idx.shape[0]

    # Fuse the two heads into one lane-dense (C, 128k) bf16 matmul.
    nc = params["lin1_w"].shape[1]
    LP = max(128, _round_up(2 * nc, 128))
    w_cat = jnp.zeros((C, LP), jnp.float32).at[:, :nc].set(params["lin1_w"])
    b_cat = jnp.zeros((1, LP), jnp.float32).at[0, :nc].set(params["lin1_b"])
    if DUAL_HEAD:
        w_cat = w_cat.at[:, nc:2 * nc].set(params["lin2_w"])
        b_cat = b_cat.at[0, nc:2 * nc].set(params["lin2_b"])
    w_cat = w_cat.astype(jnp.bfloat16)

    tile_p_eff = min(tile_p, _round_up(P, 8))
    P_pad = _round_up(P, tile_p_eff)
    idx_pad = jnp.pad(flat_idx, (0, P_pad - P))        # padded rows read row 0

    feats_pad, logits_pad = head_pallas(feat.reshape(R, C), idx_pad,
                                        w_cat, b_cat, tile_p=tile_p_eff)
    preds = {"feats": feats_pad[:P], "seg_logit": logits_pad[:P, :nc]}
    if DUAL_HEAD:
        preds["seg_logit2"] = logits_pad[:P, nc:2 * nc]
    return preds


# ---------------------------------------------------------------------------
# Pure-JAX reference (f32) for verification
# ---------------------------------------------------------------------------
def net2dseg_reference(params, data_batch):
    img = data_batch["img"]
    img_indices = data_batch["img_indices"]
    x = jnp.transpose(img, (0, 2, 3, 1))
    feat = lax.conv_general_dilated(
        x, params["conv_w"], window_strides=(1, 1), padding="SAME",
        dimension_numbers=("NHWC", "HWIO", "NHWC"))
    feat = jnp.maximum(feat + params["conv_b"], 0.0)

    feats = jnp.concatenate(
        [feat[i][img_indices[i][:, 0], img_indices[i][:, 1]]
         for i in range(img.shape[0])], axis=0)
    out = {
        "feats": feats,
        "seg_logit": feats @ params["lin1_w"] + params["lin1_b"],
    }
    if DUAL_HEAD:
        out["seg_logit2"] = feats @ params["lin2_w"] + params["lin2_b"]
    return out


if __name__ == "__main__":
    key = jax.random.PRNGKey(0)
    k_img, k_cw, k_cb, k_w1, k_b1, k_w2, k_b2, k_r, k_c = jax.random.split(key, 9)

    N, Cin, H, W = 2, 3, 16, 16
    P_per_img = 24  # points sampled per image

    img = jax.random.normal(k_img, (N, Cin, H, W), dtype=jnp.float32)
    rows = jax.random.randint(k_r, (N, P_per_img), 0, H, dtype=jnp.int32)
    cols = jax.random.randint(k_c, (N, P_per_img), 0, W, dtype=jnp.int32)
    img_indices = [jnp.stack([rows[i], cols[i]], axis=-1) for i in range(N)]

    params = {
        "conv_w": 0.05 * jax.random.normal(k_cw, (3, 3, Cin, FEAT_CHANNELS), jnp.float32),
        "conv_b": 0.05 * jax.random.normal(k_cb, (FEAT_CHANNELS,), jnp.float32),
        "lin1_w": 0.05 * jax.random.normal(k_w1, (FEAT_CHANNELS, NUM_CLASSES), jnp.float32),
        "lin1_b": 0.05 * jax.random.normal(k_b1, (NUM_CLASSES,), jnp.float32),
        "lin2_w": 0.05 * jax.random.normal(k_w2, (FEAT_CHANNELS, NUM_CLASSES), jnp.float32),
        "lin2_b": 0.05 * jax.random.normal(k_b2, (NUM_CLASSES,), jnp.float32),
    }

    data_batch = {"img": img, "img_indices": img_indices}

    preds = net2dseg_forward(params, data_batch)
    preds = jax.tree_util.tree_map(jax.block_until_ready, preds)

    ref = net2dseg_reference(params, data_batch)
    names = ["feats", "seg_logit"] + (["seg_logit2"] if DUAL_HEAD else [])
    for name in names:
        assert preds[name].shape == ref[name].shape, (name, preds[name].shape, ref[name].shape)
        # bf16 MXU operands with f32 accumulation -> bf16-level tolerance
        assert jnp.allclose(preds[name], ref[name], atol=1e-2, rtol=1e-2), name

    print("KERNEL_OK")
</pallas_src>

<mosaic_0001>
module attributes {stable_mosaic.version = 11 : i64} {
  func.func @_conv_kernel(%arg0: i32, %arg1: i32, %arg2: memref<1x18x18x3xf32, #tpu.memory_space<vmem>>, %arg3: memref<3x3x3x64xbf16, #tpu.memory_space<vmem>>, %arg4: memref<1x64xf32, #tpu.memory_space<vmem>>, %arg5: memref<1x8x16x64xf32, #tpu.memory_space<vmem>>) attributes {dimension_semantics = [#tpu.dimension_semantics<parallel>, #tpu.dimension_semantics<parallel>], iteration_bounds = array<i64: 2, 2>, scalar_prefetch = 0 : i64, scratch_operands = 0 : i64, tpu.core_type = #tpu.core_type<tc>, window_params = [{transform_indices = @transform_0, window_bounds = array<i64: 1, 18, 18, 3>}, {pipeline_mode = #tpu.pipeline_mode<synchronous>, transform_indices = @transform_1, window_bounds = array<i64: 3, 3, 3, 64>}, {pipeline_mode = #tpu.pipeline_mode<synchronous>, transform_indices = @transform_2, window_bounds = array<i64: 1, 64>}, {transform_indices = @transform_3, window_bounds = array<i64: 1, 8, 16, 64>}]} {
    %c8_i32 = arith.constant 8 : i32
    %0 = arith.muli %arg1, %c8_i32 : i32
    %cst = arith.constant 0.000000e+00 : f32
    %1 = vector.broadcast %cst : f32 to vector<128x64xf32>
    %c0_i32 = arith.constant 0 : i32
    %2 = arith.addi %0, %c0_i32 : i32
    %c0 = arith.constant 0 : index
    %3 = arith.index_cast %2 : i32 to index
    %c0_0 = arith.constant 0 : index
    %c0_1 = arith.constant 0 : index
    %4 = vector.load %arg2[%c0, %3, %c0_0, %c0_1] : memref<1x18x18x3xf32, #tpu.memory_space<vmem>>, vector<1x8x16x3xf32>
    %5 = vector.shape_cast %4 : vector<1x8x16x3xf32> to vector<8x16x3xf32>
    %6 = vector.shape_cast %5 : vector<8x16x3xf32> to vector<128x3xf32>
    %7 = arith.truncf %6 : vector<128x3xf32> to vector<128x3xbf16>
    %c0_2 = arith.constant 0 : index
    %c0_3 = arith.constant 0 : index
    %c0_4 = arith.constant 0 : index
    %c0_5 = arith.constant 0 : index
    %8 = vector.load %arg3[%c0_2, %c0_3, %c0_4, %c0_5] : memref<3x3x3x64xbf16, #tpu.memory_space<vmem>>, vector<1x1x3x64xbf16>
    %9 = vector.shape_cast %8 : vector<1x1x3x64xbf16> to vector<3x64xbf16>
    %cst_6 = arith.constant dense<0.000000e+00> : vector<128x64xf32>
    %10 = tpu.matmul %7, %9, %cst_6 {dimension_numbers = #tpu.dot_dimension_numbers<[1], [0], [0], [1], [0, 0, 1, 1], [], []>} : vector<128x3xbf16>, vector<3x64xbf16>, vector<128x64xf32> -> vector<128x64xf32>
    %11 = arith.addf %1, %10 : vector<128x64xf32>
    %c0_i32_7 = arith.constant 0 : i32
    %12 = arith.addi %0, %c0_i32_7 : i32
    %c0_8 = arith.constant 0 : index
    %13 = arith.index_cast %12 : i32 to index
    %c1 = arith.constant 1 : index
    %c0_9 = arith.constant 0 : index
    %14 = vector.load %arg2[%c0_8, %13, %c1, %c0_9] : memref<1x18x18x3xf32, #tpu.memory_space<vmem>>, vector<1x8x16x3xf32>
    %15 = vector.shape_cast %14 : vector<1x8x16x3xf32> to vector<8x16x3xf32>
    %16 = vector.shape_cast %15 : vector<8x16x3xf32> to vector<128x3xf32>
    %17 = arith.truncf %16 : vector<128x3xf32> to vector<128x3xbf16>
    %c0_10 = arith.constant 0 : index
    %c1_11 = arith.constant 1 : index
    %c0_12 = arith.constant 0 : index
    %c0_13 = arith.constant 0 : index
    %18 = vector.load %arg3[%c0_10, %c1_11, %c0_12, %c0_13] : memref<3x3x3x64xbf16, #tpu.memory_space<vmem>>, vector<1x1x3x64xbf16>
    %19 = vector.shape_cast %18 : vector<1x1x3x64xbf16> to vector<3x64xbf16>
    %cst_14 = arith.constant dense<0.000000e+00> : vector<128x64xf32>
    %20 = tpu.matmul %17, %19, %cst_14 {dimension_numbers = #tpu.dot_dimension_numbers<[1], [0], [0], [1], [0, 0, 1, 1], [], []>} : vector<128x3xbf16>, vector<3x64xbf16>, vector<128x64xf32> -> vector<128x64xf32>
    %21 = arith.addf %11, %20 : vector<128x64xf32>
    %c0_i32_15 = arith.constant 0 : i32
    %22 = arith.addi %0, %c0_i32_15 : i32
    %c0_16 = arith.constant 0 : index
    %23 = arith.index_cast %22 : i32 to index
    %c2 = arith.constant 2 : index
    %c0_17 = arith.constant 0 : index
    %24 = vector.load %arg2[%c0_16, %23, %c2, %c0_17] : memref<1x18x18x3xf32, #tpu.memory_space<vmem>>, vector<1x8x16x3xf32>
    %25 = vector.shape_cast %24 : vector<1x8x16x3xf32> to vector<8x16x3xf32>
    %26 = vector.shape_cast %25 : vector<8x16x3xf32> to vector<128x3xf32>
    %27 = arith.truncf %26 : vector<128x3xf32> to vector<128x3xbf16>
    %c0_18 = arith.constant 0 : index
    %c2_19 = arith.constant 2 : index
    %c0_20 = arith.constant 0 : index
    %c0_21 = arith.constant 0 : index
    %28 = vector.load %arg3[%c0_18, %c2_19, %c0_20, %c0_21] : memref<3x3x3x64xbf16, #tpu.memory_space<vmem>>, vector<1x1x3x64xbf16>
    %29 = vector.shape_cast %28 : vector<1x1x3x64xbf16> to vector<3x64xbf16>
    %cst_22 = arith.constant dense<0.000000e+00> : vector<128x64xf32>
    %30 = tpu.matmul %27, %29, %cst_22 {dimension_numbers = #tpu.dot_dimension_numbers<[1], [0], [0], [1], [0, 0, 1, 1], [], []>} : vector<128x3xbf16>, vector<3x64xbf16>, vector<128x64xf32> -> vector<128x64xf32>
    %31 = arith.addf %21, %30 : vector<128x64xf32>
    %c1_i32 = arith.constant 1 : i32
    %32 = arith.addi %0, %c1_i32 : i32
    %c0_23 = arith.constant 0 : index
    %33 = arith.index_cast %32 : i32 to index
    %c0_24 = arith.constant 0 : index
    %c0_25 = arith.constant 0 : index
    %34 = vector.load %arg2[%c0_23, %33, %c0_24, %c0_25] : memref<1x18x18x3xf32, #tpu.memory_space<vmem>>, vector<1x8x16x3xf32>
    %35 = vector.shape_cast %34 : vector<1x8x16x3xf32> to vector<8x16x3xf32>
    %36 = vector.shape_cast %35 : vector<8x16x3xf32> to vector<128x3xf32>
    %37 = arith.truncf %36 : vector<128x3xf32> to vector<128x3xbf16>
    %c1_26 = arith.constant 1 : index
    %c0_27 = arith.constant 0 : index
    %c0_28 = arith.constant 0 : index
    %c0_29 = arith.constant 0 : index
    %38 = vector.load %arg3[%c1_26, %c0_27, %c0_28, %c0_29] : memref<3x3x3x64xbf16, #tpu.memory_space<vmem>>, vector<1x1x3x64xbf16>
    %39 = vector.shape_cast %38 : vector<1x1x3x64xbf16> to vector<3x64xbf16>
    %cst_30 = arith.constant dense<0.000000e+00> : vector<128x64xf32>
    %40 = tpu.matmul %37, %39, %cst_30 {dimension_numbers = #tpu.dot_dimension_numbers<[1], [0], [0], [1], [0, 0, 1, 1], [], []>} : vector<128x3xbf16>, vector<3x64xbf16>, vector<128x64xf32> -> vector<128x64xf32>
    %41 = arith.addf %31, %40 : vector<128x64xf32>
    %c1_i32_31 = arith.constant 1 : i32
    %42 = arith.addi %0, %c1_i32_31 : i32
    %c0_32 = arith.constant 0 : index
    %43 = arith.index_cast %42 : i32 to index
    %c1_33 = arith.constant 1 : index
    %c0_34 = arith.constant 0 : index
    %44 = vector.load %arg2[%c0_32, %43, %c1_33, %c0_34] : memref<1x18x18x3xf32, #tpu.memory_space<vmem>>, vector<1x8x16x3xf32>
    %45 = vector.shape_cast %44 : vector<1x8x16x3xf32> to vector<8x16x3xf32>
    %46 = vector.shape_cast %45 : vector<8x16x3xf32> to vector<128x3xf32>
    %47 = arith.truncf %46 : vector<128x3xf32> to vector<128x3xbf16>
    %c1_35 = arith.constant 1 : index
    %c1_36 = arith.constant 1 : index
    %c0_37 = arith.constant 0 : index
    %c0_38 = arith.constant 0 : index
    %48 = vector.load %arg3[%c1_35, %c1_36, %c0_37, %c0_38] : memref<3x3x3x64xbf16, #tpu.memory_space<vmem>>, vector<1x1x3x64xbf16>
    %49 = vector.shape_cast %48 : vector<1x1x3x64xbf16> to vector<3x64xbf16>
    %cst_39 = arith.constant dense<0.000000e+00> : vector<128x64xf32>
    %50 = tpu.matmul %47, %49, %cst_39 {dimension_numbers = #tpu.dot_dimension_numbers<[1], [0], [0], [1], [0, 0, 1, 1], [], []>} : vector<128x3xbf16>, vector<3x64xbf16>, vector<128x64xf32> -> vector<128x64xf32>
    %51 = arith.addf %41, %50 : vector<128x64xf32>
    %c1_i32_40 = arith.constant 1 : i32
    %52 = arith.addi %0, %c1_i32_40 : i32
    %c0_41 = arith.constant 0 : index
    %53 = arith.index_cast %52 : i32 to index
    %c2_42 = arith.constant 2 : index
    %c0_43 = arith.constant 0 : index
    %54 = vector.load %arg2[%c0_41, %53, %c2_42, %c0_43] : memref<1x18x18x3xf32, #tpu.memory_space<vmem>>, vector<1x8x16x3xf32>
    %55 = vector.shape_cast %54 : vector<1x8x16x3xf32> to vector<8x16x3xf32>
    %56 = vector.shape_cast %55 : vector<8x16x3xf32> to vector<128x3xf32>
    %57 = arith.truncf %56 : vector<128x3xf32> to vector<128x3xbf16>
    %c1_44 = arith.constant 1 : index
    %c2_45 = arith.constant 2 : index
    %c0_46 = arith.constant 0 : index
    %c0_47 = arith.constant 0 : index
    %58 = vector.load %arg3[%c1_44, %c2_45, %c0_46, %c0_47] : memref<3x3x3x64xbf16, #tpu.memory_space<vmem>>, vector<1x1x3x64xbf16>
    %59 = vector.shape_cast %58 : vector<1x1x3x64xbf16> to vector<3x64xbf16>
    %cst_48 = arith.constant dense<0.000000e+00> : vector<128x64xf32>
    %60 = tpu.matmul %57, %59, %cst_48 {dimension_numbers = #tpu.dot_dimension_numbers<[1], [0], [0], [1], [0, 0, 1, 1], [], []>} : vector<128x3xbf16>, vector<3x64xbf16>, vector<128x64xf32> -> vector<128x64xf32>
    %61 = arith.addf %51, %60 : vector<128x64xf32>
    %c2_i32 = arith.constant 2 : i32
    %62 = arith.addi %0, %c2_i32 : i32
    %c0_49 = arith.constant 0 : index
    %63 = arith.index_cast %62 : i32 to index
    %c0_50 = arith.constant 0 : index
    %c0_51 = arith.constant 0 : index
    %64 = vector.load %arg2[%c0_49, %63, %c0_50, %c0_51] : memref<1x18x18x3xf32, #tpu.memory_space<vmem>>, vector<1x8x16x3xf32>
    %65 = vector.shape_cast %64 : vector<1x8x16x3xf32> to vector<8x16x3xf32>
    %66 = vector.shape_cast %65 : vector<8x16x3xf32> to vector<128x3xf32>
    %67 = arith.truncf %66 : vector<128x3xf32> to vector<128x3xbf16>
    %c2_52 = arith.constant 2 : index
    %c0_53 = arith.constant 0 : index
    %c0_54 = arith.constant 0 : index
    %c0_55 = arith.constant 0 : index
    %68 = vector.load %arg3[%c2_52, %c0_53, %c0_54, %c0_55] : memref<3x3x3x64xbf16, #tpu.memory_space<vmem>>, vector<1x1x3x64xbf16>
    %69 = vector.shape_cast %68 : vector<1x1x3x64xbf16> to vector<3x64xbf16>
    %cst_56 = arith.constant dense<0.000000e+00> : vector<128x64xf32>
    %70 = tpu.matmul %67, %69, %cst_56 {dimension_numbers = #tpu.dot_dimension_numbers<[1], [0], [0], [1], [0, 0, 1, 1], [], []>} : vector<128x3xbf16>, vector<3x64xbf16>, vector<128x64xf32> -> vector<128x64xf32>
    %71 = arith.addf %61, %70 : vector<128x64xf32>
    %c2_i32_57 = arith.constant 2 : i32
    %72 = arith.addi %0, %c2_i32_57 : i32
    %c0_58 = arith.constant 0 : index
    %73 = arith.index_cast %72 : i32 to index
    %c1_59 = arith.constant 1 : index
    %c0_60 = arith.constant 0 : index
    %74 = vector.load %arg2[%c0_58, %73, %c1_59, %c0_60] : memref<1x18x18x3xf32, #tpu.memory_space<vmem>>, vector<1x8x16x3xf32>
    %75 = vector.shape_cast %74 : vector<1x8x16x3xf32> to vector<8x16x3xf32>
    %76 = vector.shape_cast %75 : vector<8x16x3xf32> to vector<128x3xf32>
    %77 = arith.truncf %76 : vector<128x3xf32> to vector<128x3xbf16>
    %c2_61 = arith.constant 2 : index
    %c1_62 = arith.constant 1 : index
    %c0_63 = arith.constant 0 : index
    %c0_64 = arith.constant 0 : index
    %78 = vector.load %arg3[%c2_61, %c1_62, %c0_63, %c0_64] : memref<3x3x3x64xbf16, #tpu.memory_space<vmem>>, vector<1x1x3x64xbf16>
    %79 = vector.shape_cast %78 : vector<1x1x3x64xbf16> to vector<3x64xbf16>
    %cst_65 = arith.constant dense<0.000000e+00> : vector<128x64xf32>
    %80 = tpu.matmul %77, %79, %cst_65 {dimension_numbers = #tpu.dot_dimension_numbers<[1], [0], [0], [1], [0, 0, 1, 1], [], []>} : vector<128x3xbf16>, vector<3x64xbf16>, vector<128x64xf32> -> vector<128x64xf32>
    %81 = arith.addf %71, %80 : vector<128x64xf32>
    %c2_i32_66 = arith.constant 2 : i32
    %82 = arith.addi %0, %c2_i32_66 : i32
    %c0_67 = arith.constant 0 : index
    %83 = arith.index_cast %82 : i32 to index
    %c2_68 = arith.constant 2 : index
    %c0_69 = arith.constant 0 : index
    %84 = vector.load %arg2[%c0_67, %83, %c2_68, %c0_69] : memref<1x18x18x3xf32, #tpu.memory_space<vmem>>, vector<1x8x16x3xf32>
    %85 = vector.shape_cast %84 : vector<1x8x16x3xf32> to vector<8x16x3xf32>
    %86 = vector.shape_cast %85 : vector<8x16x3xf32> to vector<128x3xf32>
    %87 = arith.truncf %86 : vector<128x3xf32> to vector<128x3xbf16>
    %c2_70 = arith.constant 2 : index
    %c2_71 = arith.constant 2 : index
    %c0_72 = arith.constant 0 : index
    %c0_73 = arith.constant 0 : index
    %88 = vector.load %arg3[%c2_70, %c2_71, %c0_72, %c0_73] : memref<3x3x3x64xbf16, #tpu.memory_space<vmem>>, vector<1x1x3x64xbf16>
    %89 = vector.shape_cast %88 : vector<1x1x3x64xbf16> to vector<3x64xbf16>
    %cst_74 = arith.constant dense<0.000000e+00> : vector<128x64xf32>
    %90 = tpu.matmul %87, %89, %cst_74 {dimension_numbers = #tpu.dot_dimension_numbers<[1], [0], [0], [1], [0, 0, 1, 1], [], []>} : vector<128x3xbf16>, vector<3x64xbf16>, vector<128x64xf32> -> vector<128x64xf32>
    %91 = arith.addf %81, %90 : vector<128x64xf32>
    %c0_75 = arith.constant 0 : index
    %c0_76 = arith.constant 0 : index
    %92 = vector.load %arg4[%c0_75, %c0_76] : memref<1x64xf32, #tpu.memory_space<vmem>>, vector<1x64xf32>
    %93 = vector.broadcast %92 : vector<1x64xf32> to vector<128x64xf32>
    %94 = arith.addf %91, %93 : vector<128x64xf32>
    %cst_77 = arith.constant 0.000000e+00 : f32
    %95 = vector.broadcast %cst_77 : f32 to vector<128x64xf32>
    %96 = arith.maximumf %94, %95 : vector<128x64xf32>
    %97 = vector.shape_cast %96 : vector<128x64xf32> to vector<1x8x16x64xf32>
    %c0_78 = arith.constant 0 : index
    %c0_79 = arith.constant 0 : index
    %c0_80 = arith.constant 0 : index
    %c0_81 = arith.constant 0 : index
    %98 = vector.load %arg5[%c0_78, %c0_79, %c0_80, %c0_81] : memref<1x8x16x64xf32, #tpu.memory_space<vmem>>, vector<1x8x16x64xf32>
    tpu.vector_store %arg5[%c0_78, %c0_79, %c0_80, %c0_81], %97 {strides = array<i32>} : memref<1x8x16x64xf32, #tpu.memory_space<vmem>>, vector<1x8x16x64xf32>,
    return
  }
  func.func @transform_0(%arg0: i32, %arg1: i32) -> (i32, i32, i32, i32) {
    %c0_i32 = arith.constant 0 : i32
    %c0_i32_0 = arith.constant 0 : i32
    %c0_i32_1 = arith.constant 0 : i32
    %c0_i32_2 = arith.constant 0 : i32
    return %arg0, %c0_i32, %c0_i32_0, %c0_i32_1 : i32, i32, i32, i32
  }
  func.func @transform_1(%arg0: i32, %arg1: i32) -> (i32, i32, i32, i32) {
    %c0_i32 = arith.constant 0 : i32
    %c0_i32_0 = arith.constant 0 : i32
    %c0_i32_1 = arith.constant 0 : i32
    %c0_i32_2 = arith.constant 0 : i32
    %c0_i32_3 = arith.constant 0 : i32
    return %c0_i32, %c0_i32_0, %c0_i32_1, %c0_i32_2 : i32, i32, i32, i32
  }
  func.func @transform_2(%arg0: i32, %arg1: i32) -> (i32, i32) {
    %c0_i32 = arith.constant 0 : i32
    %c0_i32_0 = arith.constant 0 : i32
    %c0_i32_1 = arith.constant 0 : i32
    return %c0_i32, %c0_i32_0 : i32, i32
  }
  func.func @transform_3(%arg0: i32, %arg1: i32) -> (i32, i32, i32, i32) {
    %c0_i32 = arith.constant 0 : i32
    %c0_i32_0 = arith.constant 0 : i32
    %c0_i32_1 = arith.constant 0 : i32
    return %arg0, %arg1, %c0_i32, %c0_i32_0 : i32, i32, i32, i32
  }
}

</mosaic_0001>

<llo_original>
// kernel: tpu_custom_call.1
$region0: #{tpu_custom_call.1}
  #allocation0 [shape = 'u32[]', space=smem, size = 0x4, offset = 0x4, fixed_abs, tag = 'smem constant byte address 0x4 - core index']
  #allocation1 [shape = 'u32[144,128]{1,0:T(1,128)}', space=vmem, size = 0x12000, scoped, tag = 'internal scratch']
  %s0 = inlined_call_operand.vmem [shape: f32[2,18,18,3], index: 0, kind: input, shape index: {}]
  %s1 = inlined_call_operand.vmem [shape: bf16[3,3,3,64], index: 1, kind: input, shape index: {}]
  %s2 = inlined_call_operand.vmem [shape: f32[1,64], index: 2, kind: input, shape index: {}]
  %s3 = inlined_call_operand.hbm [shape: f32[2,16,16,64], index: 3, kind: output, shape index: {}]
  %s4 = sld [smem:[#allocation0]]
  $region45: #{tpu_custom_call.1} parent=0
    _
  %s6 = ssub.s32 1, %s4
  %s7 = scalar_select 0, %s6, %s4
  $region1: #{tpu_custom_call.1} parent=0
    #allocation2 [shape = 'u8[131072]{0}', space=vmem, size = 0x20000, scoped, tag = 'output window, operand 0']
    #allocation3 [shape = 's32[2]{0}', space=sflag, size = 0x8, scoped, tag = 'scoped memory for tpu_custom_call.1']
    %8 = vsyncpa [#allocation3], 0
    %s9 = scalar_lea.sflag [#allocation3], 1
    %10 = vsyncpa %s9, 0
    loop: start=0, step=1, limit=6
    $region2: #{tpu_custom_call.1} parent=1 // loop_pre_header
      _
    $region3: #{tpu_custom_call.1} parent=1 // loop_header
      %s12 = sphi 0, %s16
      %p13 = scmp.ge.s32.totalorder %s12, 6
      %s19 = sphi 0, %s31
      %s20 = sphi 0, %s27
      %s21 = sphi 0, %s19
      %s22 = sphi 0, %s20
      %s23 = sphi 0, %s21
      %s24 = sphi 0, %s22
      %s34 = sphi 0, %s36
      %s37 = sphi 0, %s34
      %s38 = sphi 0, %s37
      %s54 = sphi 0, %s38
      %s58 = sphi 0, %s58
      %s60 = sphi 0, %s58
      %s61 = sphi 0, %s60
      %s75 = sphi 0, %s61
      %s79 = sphi 0, %s79
      %s81 = sphi 0, %s79
      %s82 = sphi 0, %s81
      %s96 = sphi 0, %s82
      %s104 = sphi 0, %s106
      %s107 = sphi 0, %s104
      %s108 = sphi 0, %s107
      %s124 = sphi 0, %s108
    $region4: #{tpu_custom_call.1} parent=1 // loop_header_branch
      %15 = sbr.rel (%p13) target = $region8
    $region5: #{tpu_custom_call.1} parent=1 // loop_body
      %s17 = ssub.s32 %s12, 1
      %s18 = ssub.s32 %s12, 2
      %s25 = sadd.s32 1, %s20
      %p26 = scmp.ge.s32.totalorder %s25, 2
      %s27 = scalar_select %p26, 0, %s25
      %s28 = sadd.s32 1, %s19
      %s29 = scalar_select %p26, %s28, %s19
      %p30 = scmp.ge.s32.totalorder %s29, 2
      %s31 = scalar_select %p30, 0, %s29
      %s32 = ssub.s32 %s19, %s31
      %p33 = scmp.eq.s32.totalorder %s32, 0
      %s35 = sadd.s32 %s34, 1
      %s36 = scalar_select %p33, %s34, %s35
      %p39 = pneg %p33
      %p40 = scmp.eq.s32.totalorder %s12, 3
      %p41 = por %p39, %p40
      %p42 = scmp.ne.s32.totalorder %s34, %s37
      %p43 = scmp.eq.s32.totalorder %s12, 0
      %p44 = por %p42, %p43
      %p45 = scmp.ne.s32.totalorder %s34, %s37
      %p46 = scmp.eq.s32.totalorder %s17, 3
      %p47 = por %p45, %p46
      %p48 = scmp.ne.s32.totalorder %s37, %s38
      %p49 = scmp.eq.s32.totalorder %s17, 0
      %p50 = por %p48, %p49
      %p51 = scmp.ne.s32.totalorder %s37, %s38
      %p52 = scmp.eq.s32.totalorder %s18, 3
      %p53 = por %p51, %p52
      %p55 = scmp.ne.s32.totalorder %s38, %s54
      %p56 = scmp.eq.s32.totalorder %s18, 0
      %p57 = por %p55, %p56
      %s59 = sadd.s32 %s58, 1
      %p62 = scmp.eq.s32.totalorder %s12, 3
      %p63 = scmp.ne.s32.totalorder %s58, %s60
      %p64 = scmp.eq.s32.totalorder %s12, 0
      %p65 = por %p63, %p64
      %p66 = scmp.ne.s32.totalorder %s58, %s60
      %p67 = scmp.eq.s32.totalorder %s17, 3
      %p68 = por %p66, %p67
      %p69 = scmp.ne.s32.totalorder %s60, %s61
      %p70 = scmp.eq.s32.totalorder %s17, 0
      %p71 = por %p69, %p70
      %p72 = scmp.ne.s32.totalorder %s60, %s61
      %p73 = scmp.eq.s32.totalorder %s18, 3
      %p74 = por %p72, %p73
      %p76 = scmp.ne.s32.totalorder %s61, %s75
      %p77 = scmp.eq.s32.totalorder %s18, 0
      %p78 = por %p76, %p77
      %s80 = sadd.s32 %s79, 1
      %p83 = scmp.eq.s32.totalorder %s12, 3
      %p84 = scmp.ne.s32.totalorder %s79, %s81
      %p85 = scmp.eq.s32.totalorder %s12, 0
      %p86 = por %p84, %p85
      %p87 = scmp.ne.s32.totalorder %s79, %s81
      %p88 = scmp.eq.s32.totalorder %s17, 3
      %p89 = por %p87, %p88
      %p90 = scmp.ne.s32.totalorder %s81, %s82
      %p91 = scmp.eq.s32.totalorder %s17, 0
      %p92 = por %p90, %p91
      %p93 = scmp.ne.s32.totalorder %s81, %s82
      %p94 = scmp.eq.s32.totalorder %s18, 3
      %p95 = por %p93, %p94
      %p97 = scmp.ne.s32.totalorder %s82, %s96
      %p98 = scmp.eq.s32.totalorder %s18, 0
      %p99 = por %p97, %p98
      %s100 = ssub.s32 %s19, %s31
      %s101 = ssub.s32 %s20, %s27
      %s102 = sor.u32 %s100, %s101
      %p103 = scmp.eq.s32.totalorder %s102, 0
      %s105 = sadd.s32 %s104, 1
      %s106 = scalar_select %p103, %s104, %s105
      %p109 = pneg %p103
      %p110 = scmp.eq.s32.totalorder %s12, 3
      %p111 = por %p109, %p110
      %p112 = scmp.ne.s32.totalorder %s104, %s107
      %p113 = scmp.eq.s32.totalorder %s12, 0
      %p114 = por %p112, %p113
      %p115 = scmp.ne.s32.totalorder %s104, %s107
      %p116 = scmp.eq.s32.totalorder %s17, 3
      %p117 = por %p115, %p116
      %p118 = scmp.ne.s32.totalorder %s107, %s108
      %p119 = scmp.eq.s32.totalorder %s17, 0
      %p120 = por %p118, %p119
      %p121 = scmp.ne.s32.totalorder %s107, %s108
      %p122 = scmp.eq.s32.totalorder %s18, 3
      %p123 = por %p121, %p122
      %p125 = scmp.ne.s32.totalorder %s108, %s124
      %p126 = scmp.eq.s32.totalorder %s18, 0
      %p127 = por %p125, %p126
      %p128 = scmp.le.s32.totalorder 1, %s12
      %p129 = scmp.lt.s32.totalorder %s12, 5
      %p130 = pnand %p128, %p129
      %p131 = pneg %p130
      // Predicated region
      $region9: #{tpu_custom_call.1} parent=5 // pred_check
        _
      $region10: #{tpu_custom_call.1} parent=5 // pred_check_branch
        %133 = sbr.rel (%p130) target = $region12
      $region11: #{tpu_custom_call.1} parent=5 // pred_region
        %s134 = ssub.s32 %s12, 1
        // Predicated region
        $region13: #{tpu_custom_call.1} parent=11 // pred_check
          %p135 = pneg %p71
        $region14: #{tpu_custom_call.1} parent=11 // pred_check_branch
          %137 = sbr.rel (%p135) target = $region16
        $region15: #{tpu_custom_call.1} parent=11 // pred_region
          _
        $region16: #{tpu_custom_call.1} parent=11 // pred_fallthru
          _
        // Predicated region
        $region17: #{tpu_custom_call.1} parent=11 // pred_check
          %p138 = pneg %p92
        $region18: #{tpu_custom_call.1} parent=11 // pred_check_branch
          %140 = sbr.rel (%p138) target = $region20
        $region19: #{tpu_custom_call.1} parent=11 // pred_region
          _
        $region20: #{tpu_custom_call.1} parent=11 // pred_fallthru
          _
      $region12: #{tpu_custom_call.1} parent=5 // pred_fallthru
        _
      %p141 = scmp.lt.s32.totalorder %s12, 4
      // Predicated region
      $region21: #{tpu_custom_call.1} parent=5 // pred_check
        %p142 = pneg %p141
      $region22: #{tpu_custom_call.1} parent=5 // pred_check_branch
        %144 = sbr.rel (%p142) target = $region24
      $region23: #{tpu_custom_call.1} parent=5 // pred_region
        // Predicated region
        $region25: #{tpu_custom_call.1} parent=23 // pred_check
          %p145 = pneg %p44
        $region26: #{tpu_custom_call.1} parent=23 // pred_check_branch
          %147 = sbr.rel (%p145) target = $region28
        $region27: #{tpu_custom_call.1} parent=23 // pred_region
          %p148 = scmp.lt.s32.totalorder %s19, 1
          %s149 = scalar_select %p148, %s19, 1
          %s150 = smul.addr %s149, 54
          %s151 = smul.addr %s150, 8
          %s152 = scalar_lea.vmem %s0, %s151
        $region28: #{tpu_custom_call.1} parent=23 // pred_fallthru
          _
      $region24: #{tpu_custom_call.1} parent=5 // pred_fallthru
        _
      %p153 = scmp.le.s32.totalorder 1, %s12
      %p154 = scmp.lt.s32.totalorder %s12, 5
      %p155 = pnand %p153, %p154
      %p156 = pneg %p155
      // Predicated region
      $region29: #{tpu_custom_call.1} parent=5 // pred_check
        _
      $region30: #{tpu_custom_call.1} parent=5 // pred_check_branch
        %158 = sbr.rel (%p155) target = $region32
      $region31: #{tpu_custom_call.1} parent=5 // pred_region
        %s159 = ssub.s32 %s12, 1
        %p160 = scmp.lt.s32.totalorder %s21, 1
        %s161 = scalar_select %p160, %s21, 1
        %s162 = smul.addr %s161, 54
        %s163 = smul.addr %s162, 8
        %s164 = scalar_lea.vmem %s0, %s163
        %p165 = pneg %p50
        %p166 = pneg %p47
        %p167 = pneg %p71
        %p168 = pneg %p68
        %p169 = pneg %p92
        %p170 = pneg %p89
        %p171 = pneg %p120
        %p172 = pneg %p117
        %s173 = sand.u32 %s107, 1
        %s174 = scalar_lea.sflag [#allocation3], %s173
        %s175 = sand.u32 %s107, 1
        %s176 = smul.addr %s175, 128
        %s177 = scalar_lea.vmem [#allocation2], %s176
        %p178 = scmp.lt.s32.totalorder %s21, 1
        %s179 = scalar_select %p178, %s21, 1
        %s180 = smul.addr %s179, 54
        %s181 = smul.addr %s180, 8
        %s182 = scalar_lea.vmem %s0, %s181
        %s183 = smul.u32 8, %s22
        %s185 = smul.u32 %s22, 8
        %s186 = smul.u32 %s185, 24
        %s187 = scalar_lea.vmem %s182, %s186
        %v188 = vld [vmem:[%s187] sm:$0xff]
        %v189 = vld [vmem:[%s187 + $0x8] sm:$0xff]
        %v190 = vld [vmem:[%s187 + $0x18] sm:$0xff]
        %v191 = vld [vmem:[%s187 + $0x20] sm:$0xff]
        %v192 = vld [vmem:[%s187 + $0x30] sm:$0xff]
        %v193 = vld [vmem:[%s187 + $0x38] sm:$0xff]
        %v194 = vld [vmem:[%s187 + $0x48] sm:$0xff]
        %v195 = vld [vmem:[%s187 + $0x50] sm:$0xff]
        %v196 = vld [vmem:[%s187 + $0x60] sm:$0xff]
        %v197 = vld [vmem:[%s187 + $0x68] sm:$0xff]
        %v198 = vld [vmem:[%s187 + $0x78] sm:$0xff]
        %v199 = vld [vmem:[%s187 + $0x80] sm:$0xff]
        %v200 = vld [vmem:[%s187 + $0x90] sm:$0xff]
        %v201 = vld [vmem:[%s187 + $0x98] sm:$0xff]
        %v202 = vld [vmem:[%s187 + $0xa8] sm:$0xff]
        %v203 = vld [vmem:[%s187 + $0xb0] sm:$0xff]
        %v204 = vpack.c.bf16 %v189, %v188
        %v205 = vpack.c.bf16 %v191, %v190
        %v206 = vpack.c.bf16 %v193, %v192
        %v207 = vpack.c.bf16 %v195, %v194
        %v208 = vpack.c.bf16 %v197, %v196
        %v209 = vpack.c.bf16 %v199, %v198
        %v210 = vpack.c.bf16 %v201, %v200
        %v211 = vpack.c.bf16 %v203, %v202
        %v212 = vld [vmem:[%s1] sm:$0x3]
        %v213 = vld [vmem:[%s187 + $0x1] sm:$0xff]
        %v214 = vld [vmem:[%s187 + $0x9] sm:$0xff]
        %v215 = vld [vmem:[%s187 + $0x19] sm:$0xff]
        %v216 = vld [vmem:[%s187 + $0x21] sm:$0xff]
        %v217 = vld [vmem:[%s187 + $0x31] sm:$0xff]
        %v218 = vld [vmem:[%s187 + $0x39] sm:$0xff]
        %v219 = vld [vmem:[%s187 + $0x49] sm:$0xff]
        %v220 = vld [vmem:[%s187 + $0x51] sm:$0xff]
        %v221 = vld [vmem:[%s187 + $0x61] sm:$0xff]
        %v222 = vld [vmem:[%s187 + $0x69] sm:$0xff]
        %v223 = vld [vmem:[%s187 + $0x79] sm:$0xff]
        %v224 = vld [vmem:[%s187 + $0x81] sm:$0xff]
        %v225 = vld [vmem:[%s187 + $0x91] sm:$0xff]
        %v226 = vld [vmem:[%s187 + $0x99] sm:$0xff]
        %v227 = vld [vmem:[%s187 + $0xa9] sm:$0xff]
        %v228 = vld [vmem:[%s187 + $0xb1] sm:$0xff]
        %v229 = vpack.c.bf16 %v214, %v213
        %v230 = vpack.c.bf16 %v216, %v215
        %v231 = vpack.c.bf16 %v218, %v217
        %v232 = vpack.c.bf16 %v220, %v219
        %v233 = vpack.c.bf16 %v222, %v221
        %v234 = vpack.c.bf16 %v224, %v223
        %v235 = vpack.c.bf16 %v226, %v225
        %v236 = vpack.c.bf16 %v228, %v227
        %s237 = scalar_lea.vmem %s1, 2
        %v238 = vld [vmem:[%s237] sm:$0x3]
        %vm239 = vcmask 23552
        %v241 = vsel %vm239, %v229, 0
        %v244 = vsel %vm239, %v230, 0
        %v247 = vsel %vm239, %v231, 0
        %v250 = vsel %vm239, %v232, 0
        %v253 = vsel %vm239, %v233, 0
        %v256 = vsel %vm239, %v234, 0
        %v259 = vsel %vm239, %v235, 0
        %v262 = vsel %vm239, %v236, 0
        %vm264 = vcmask 1040384
        %vm265 = vcmask 1041408
        %v266 = vsel %vm264, 4294967295, 65535
        %v267 = vsel %vm265, %v266, 0
        %v269 = vand.u32 %v238, %v267
        %271 = vmatprep.subr.bf16.mxu0 0
        %272 = vmatpush1.bf16.msra.mxu0 %v269
        %273 = vmatprep.subr.bf16.mxu0 0
        %274 = vmatpush1.bf16.msra.mxu0 0
        %275 = vmatprep.subr.bf16.mxu0 0
        %276 = vmatpush1.bf16.msra.mxu0 0
        %277 = vmatprep.subr.bf16.mxu0 0
        %278 = vmatpush1.bf16.msra.mxu0 0
        %279 = vmatprep.subr.bf16.mxu0 0
        %280 = vmatpush1.bf16.msra.mxu0 0
        %281 = vmatprep.subr.bf16.mxu0 0
        %282 = vmatpush1.bf16.msra.mxu0 0
        %283 = vmatprep.subr.bf16.mxu0 0
        %284 = vmatpush1.bf16.msra.mxu0 0
        %285 = vmatprep.subr.bf16.mxu0 0
        %286 = vmatpush1.bf16.msra.mxu0 0
        %287 = vmatprep.subr.bf16.mxu0 0
        %288 = vmatpush1.bf16.msra.mxu0 0
        %289 = vmatprep.subr.bf16.mxu0 0
        %290 = vmatpush1.bf16.msra.mxu0 0
        %291 = vmatprep.subr.bf16.mxu0 0
        %292 = vmatpush1.bf16.msra.mxu0 0
        %293 = vmatprep.subr.bf16.mxu0 0
        %294 = vmatpush1.bf16.msra.mxu0 0
        %295 = vmatprep.subr.bf16.mxu0 0
        %296 = vmatpush1.bf16.msra.mxu0 0
        %297 = vmatprep.subr.bf16.mxu0 0
        %298 = vmatpush1.bf16.msra.mxu0 0
        %299 = vmatprep.subr.bf16.mxu0 0
        %300 = vmatpush1.bf16.msra.mxu0 0
        %301 = vmatprep.subr.bf16.mxu0 0
        %302 = vmatpush1.bf16.msra.mxu0 0
        %303 = vmatprep.mubr.bf16.mxu0 0
        %304 = vmatmul.mubr.bf16.gmra.mrb[0].mxu0 %v241
        %v305 = vpop.f32.mrb[0].mxu0
        %v306 = vadd.f32 0.0, %v305
        %v307 = vpop.f32.mrb[0].mxu0
        %v308 = vpop.f32.mrb[0].mxu0
        %v309 = vadd.f32 0.0, %v308
        %v310 = vpop.f32.mrb[0].mxu0
        %311 = vmatprep.mubr.bf16.mxu0 0
        %312 = vmatmul.mubr.bf16.gmra.mrb[0].mxu0 %v244
        %v313 = vpop.f32.mrb[0].mxu0
        %v314 = vadd.f32 0.0, %v313
        %v315 = vpop.f32.mrb[0].mxu0
        %v316 = vpop.f32.mrb[0].mxu0
        %v317 = vadd.f32 0.0, %v316
        %v318 = vpop.f32.mrb[0].mxu0
        %319 = vmatprep.mubr.bf16.mxu0 0
        %320 = vmatmul.mubr.bf16.gmra.mrb[0].mxu0 %v247
        %v321 = vpop.f32.mrb[0].mxu0
        %v322 = vadd.f32 0.0, %v321
        %v323 = vpop.f32.mrb[0].mxu0
        %v324 = vpop.f32.mrb[0].mxu0
        %v325 = vadd.f32 0.0, %v324
        %v326 = vpop.f32.mrb[0].mxu0
        %327 = vmatprep.mubr.bf16.mxu0 0
        %328 = vmatmul.mubr.bf16.gmra.mrb[0].mxu0 %v250
        %v329 = vpop.f32.mrb[0].mxu0
        %v330 = vadd.f32 0.0, %v329
        %v331 = vpop.f32.mrb[0].mxu0
        %v332 = vpop.f32.mrb[0].mxu0
        %v333 = vadd.f32 0.0, %v332
        %v334 = vpop.f32.mrb[0].mxu0
        %335 = vmatprep.mubr.bf16.mxu0 0
        %336 = vmatmul.mubr.bf16.gmra.mrb[0].mxu0 %v253
        %v337 = vpop.f32.mrb[0].mxu0
        %v338 = vadd.f32 0.0, %v337
        %v339 = vpop.f32.mrb[0].mxu0
        %v340 = vpop.f32.mrb[0].mxu0
        %v341 = vadd.f32 0.0, %v340
        %v342 = vpop.f32.mrb[0].mxu0
        %343 = vmatprep.mubr.bf16.mxu0 0
        %344 = vmatmul.mubr.bf16.gmra.mrb[0].mxu0 %v256
        %v345 = vpop.f32.mrb[0].mxu0
        %v346 = vadd.f32 0.0, %v345
        %v347 = vpop.f32.mrb[0].mxu0
        %v348 = vpop.f32.mrb[0].mxu0
        %v349 = vadd.f32 0.0, %v348
        %v350 = vpop.f32.mrb[0].mxu0
        %351 = vmatprep.mubr.bf16.mxu0 0
        %352 = vmatmul.mubr.bf16.gmra.mrb[0].mxu0 %v259
        %v353 = vpop.f32.mrb[0].mxu0
        %v354 = vadd.f32 0.0, %v353
        %v355 = vpop.f32.mrb[0].mxu0
        %v356 = vpop.f32.mrb[0].mxu0
        %v357 = vadd.f32 0.0, %v356
        %v358 = vpop.f32.mrb[0].mxu0
        %359 = vmatprep.mubr.bf16.mxu0 0
        %360 = vmatmul.mubr.bf16.gmra.mrb[0].mxu0 %v262
        %v361 = vpop.f32.mrb[0].mxu0
        %v362 = vadd.f32 0.0, %v361
        %v363 = vpop.f32.mrb[0].mxu0
        %v364 = vpop.f32.mrb[0].mxu0
        %v365 = vadd.f32 0.0, %v364
        %v366 = vpop.f32.mrb[0].mxu0
        %367 = vdwg.mxu0
        %v369 = vsel %vm239, %v204, 0
        %v372 = vsel %vm239, %v205, 0
        %v375 = vsel %vm239, %v206, 0
        %v378 = vsel %vm239, %v207, 0
        %v381 = vsel %vm239, %v208, 0
        %v384 = vsel %vm239, %v209, 0
        %v387 = vsel %vm239, %v210, 0
        %v390 = vsel %vm239, %v211, 0
        %v393 = vand.u32 %v212, %v267
        %395 = vmatprep.subr.bf16.mxu0 0
        %396 = vmatpush1.bf16.msra.mxu0 %v393
        %397 = vmatprep.subr.bf16.mxu0 0
        %398 = vmatpush1.bf16.msra.mxu0 0
        %399 = vmatprep.subr.bf16.mxu0 0
        %400 = vmatpush1.bf16.msra.mxu0 0
        %401 = vmatprep.subr.bf16.mxu0 0
        %402 = vmatpush1.bf16.msra.mxu0 0
        %403 = vmatprep.subr.bf16.mxu0 0
        %404 = vmatpush1.bf16.msra.mxu0 0
        %405 = vmatprep.subr.bf16.mxu0 0
        %406 = vmatpush1.bf16.msra.mxu0 0
        %407 = vmatprep.subr.bf16.mxu0 0
        %408 = vmatpush1.bf16.msra.mxu0 0
        %409 = vmatprep.subr.bf16.mxu0 0
        %410 = vmatpush1.bf16.msra.mxu0 0
        %411 = vmatprep.subr.bf16.mxu0 0
        %412 = vmatpush1.bf16.msra.mxu0 0
        %413 = vmatprep.subr.bf16.mxu0 0
        %414 = vmatpush1.bf16.msra.mxu0 0
        %415 = vmatprep.subr.bf16.mxu0 0
        %416 = vmatpush1.bf16.msra.mxu0 0
        %417 = vmatprep.subr.bf16.mxu0 0
        %418 = vmatpush1.bf16.msra.mxu0 0
        %419 = vmatprep.subr.bf16.mxu0 0
        %420 = vmatpush1.bf16.msra.mxu0 0
        %421 = vmatprep.subr.bf16.mxu0 0
        %422 = vmatpush1.bf16.msra.mxu0 0
        %423 = vmatprep.subr.bf16.mxu0 0
        %424 = vmatpush1.bf16.msra.mxu0 0
        %425 = vmatprep.subr.bf16.mxu0 0
        %426 = vmatpush1.bf16.msra.mxu0 0
        %427 = vmatprep.mubr.bf16.mxu0 0
        %428 = vmatmul.mubr.bf16.gmra.mrb[0].mxu0 %v369
        %v429 = vpop.f32.mrb[0].mxu0
        %v430 = vadd.f32 %v306, %v429
        %v431 = vpop.f32.mrb[0].mxu0
        %v432 = vpop.f32.mrb[0].mxu0
        %v433 = vadd.f32 %v309, %v432
        %v434 = vpop.f32.mrb[0].mxu0
        %435 = vmatprep.mubr.bf16.mxu0 0
        %436 = vmatmul.mubr.bf16.gmra.mrb[0].mxu0 %v372
        %v437 = vpop.f32.mrb[0].mxu0
        %v438 = vadd.f32 %v314, %v437
        %v439 = vpop.f32.mrb[0].mxu0
        %v440 = vpop.f32.mrb[0].mxu0
        %v441 = vadd.f32 %v317, %v440
        %v442 = vpop.f32.mrb[0].mxu0
        %443 = vmatprep.mubr.bf16.mxu0 0
        %444 = vmatmul.mubr.bf16.gmra.mrb[0].mxu0 %v375
        %v445 = vpop.f32.mrb[0].mxu0
        %v446 = vadd.f32 %v322, %v445
        %v447 = vpop.f32.mrb[0].mxu0
        %v448 = vpop.f32.mrb[0].mxu0
        %v449 = vadd.f32 %v325, %v448
        %v450 = vpop.f32.mrb[0].mxu0
        %451 = vmatprep.mubr.bf16.mxu0 0
        %452 = vmatmul.mubr.bf16.gmra.mrb[0].mxu0 %v378
        %v453 = vpop.f32.mrb[0].mxu0
        %v454 = vadd.f32 %v330, %v453
        %v455 = vpop.f32.mrb[0].mxu0
        %v456 = vpop.f32.mrb[0].mxu0
        %v457 = vadd.f32 %v333, %v456
        %v458 = vpop.f32.mrb[0].mxu0
        %459 = vmatprep.mubr.bf16.mxu0 0
        %460 = vmatmul.mubr.bf16.gmra.mrb[0].mxu0 %v381
        %v461 = vpop.f32.mrb[0].mxu0
        %v462 = vadd.f32 %v338, %v461
        %v463 = vpop.f32.mrb[0].mxu0
        %v464 = vpop.f32.mrb[0].mxu0
        %v465 = vadd.f32 %v341, %v464
        %v466 = vpop.f32.mrb[0].mxu0
        %467 = vmatprep.mubr.bf16.mxu0 0
        %468 = vmatmul.mubr.bf16.gmra.mrb[0].mxu0 %v384
        %v469 = vpop.f32.mrb[0].mxu0
        %v470 = vadd.f32 %v346, %v469
        %v471 = vpop.f32.mrb[0].mxu0
        %v472 = vpop.f32.mrb[0].mxu0
        %v473 = vadd.f32 %v349, %v472
        %v474 = vpop.f32.mrb[0].mxu0
        %475 = vmatprep.mubr.bf16.mxu0 0
        %476 = vmatmul.mubr.bf16.gmra.mrb[0].mxu0 %v387
        %v477 = vpop.f32.mrb[0].mxu0
        %v478 = vadd.f32 %v354, %v477
        %v479 = vpop.f32.mrb[0].mxu0
        %v480 = vpop.f32.mrb[0].mxu0
        %v481 = vadd.f32 %v357, %v480
        %v482 = vpop.f32.mrb[0].mxu0
        %483 = vmatprep.mubr.bf16.mxu0 0
        %484 = vmatmul.mubr.bf16.gmra.mrb[0].mxu0 %v390
        %v485 = vpop.f32.mrb[0].mxu0
        %v486 = vadd.f32 %v362, %v485
        %v487 = vpop.f32.mrb[0].mxu0
        %v488 = vpop.f32.mrb[0].mxu0
        %v489 = vadd.f32 %v365, %v488
        %v490 = vpop.f32.mrb[0].mxu0
        %491 = vdwg.mxu0
        %v492 = vld [vmem:[%s187 + $0x2] sm:$0xff]
        %v493 = vld [vmem:[%s187 + $0xa] sm:$0xff]
        %v494 = vld [vmem:[%s187 + $0x1a] sm:$0xff]
        %v495 = vld [vmem:[%s187 + $0x22] sm:$0xff]
        %v496 = vld [vmem:[%s187 + $0x32] sm:$0xff]
        %v497 = vld [vmem:[%s187 + $0x3a] sm:$0xff]
        %v498 = vld [vmem:[%s187 + $0x4a] sm:$0xff]
        %v499 = vld [vmem:[%s187 + $0x52] sm:$0xff]
        %v500 = vld [vmem:[%s187 + $0x62] sm:$0xff]
        %v501 = vld [vmem:[%s187 + $0x6a] sm:$0xff]
        %v502 = vld [vmem:[%s187 + $0x7a] sm:$0xff]
        %v503 = vld [vmem:[%s187 + $0x82] sm:$0xff]
        %v504 = vld [vmem:[%s187 + $0x92] sm:$0xff]
        %v505 = vld [vmem:[%s187 + $0x9a] sm:$0xff]
        %v506 = vld [vmem:[%s187 + $0xaa] sm:$0xff]
        %v507 = vld [vmem:[%s187 + $0xb2] sm:$0xff]
        %v508 = vpack.c.bf16 %v493, %v492
        %v509 = vpack.c.bf16 %v495, %v494
        %v510 = vpack.c.bf16 %v497, %v496
        %v511 = vpack.c.bf16 %v499, %v498
        %v512 = vpack.c.bf16 %v501, %v500
        %v513 = vpack.c.bf16 %v503, %v502
        %v514 = vpack.c.bf16 %v505, %v504
        %v515 = vpack.c.bf16 %v507, %v506
        %s516 = scalar_lea.vmem %s1, 4
        %v517 = vld [vmem:[%s516] sm:$0x3]
        %v519 = vsel %vm239, %v508, 0
        %v522 = vsel %vm239, %v509, 0
        %v525 = vsel %vm239, %v510, 0
        %v528 = vsel %vm239, %v511, 0
        %v531 = vsel %vm239, %v512, 0
        %v534 = vsel %vm239, %v513, 0
        %v537 = vsel %vm239, %v514, 0
        %v540 = vsel %vm239, %v515, 0
        %v543 = vand.u32 %v517, %v267
        %545 = vmatprep.subr.bf16.mxu0 0
        %546 = vmatpush1.bf16.msra.mxu0 %v543
        %547 = vmatprep.subr.bf16.mxu0 0
        %548 = vmatpush1.bf16.msra.mxu0 0
        %549 = vmatprep.subr.bf16.mxu0 0
        %550 = vmatpush1.bf16.msra.mxu0 0
        %551 = vmatprep.subr.bf16.mxu0 0
        %552 = vmatpush1.bf16.msra.mxu0 0
        %553 = vmatprep.subr.bf16.mxu0 0
        %554 = vmatpush1.bf16.msra.mxu0 0
        %555 = vmatprep.subr.bf16.mxu0 0
        %556 = vmatpush1.bf16.msra.mxu0 0
        %557 = vmatprep.subr.bf16.mxu0 0
        %558 = vmatpush1.bf16.msra.mxu0 0
        %559 = vmatprep.subr.bf16.mxu0 0
        %560 = vmatpush1.bf16.msra.mxu0 0
        %561 = vmatprep.subr.bf16.mxu0 0
        %562 = vmatpush1.bf16.msra.mxu0 0
        %563 = vmatprep.subr.bf16.mxu0 0
        %564 = vmatpush1.bf16.msra.mxu0 0
        %565 = vmatprep.subr.bf16.mxu0 0
        %566 = vmatpush1.bf16.msra.mxu0 0
        %567 = vmatprep.subr.bf16.mxu0 0
        %568 = vmatpush1.bf16.msra.mxu0 0
        %569 = vmatprep.subr.bf16.mxu0 0
        %570 = vmatpush1.bf16.msra.mxu0 0
        %571 = vmatprep.subr.bf16.mxu0 0
        %572 = vmatpush1.bf16.msra.mxu0 0
        %573 = vmatprep.subr.bf16.mxu0 0
        %574 = vmatpush1.bf16.msra.mxu0 0
        %575 = vmatprep.subr.bf16.mxu0 0
        %576 = vmatpush1.bf16.msra.mxu0 0
        %577 = vmatprep.mubr.bf16.mxu0 0
        %578 = vmatmul.mubr.bf16.gmra.mrb[0].mxu0 %v519
        %v579 = vpop.f32.mrb[0].mxu0
        %v580 = vadd.f32 0.0, %v579
        %v581 = vpop.f32.mrb[0].mxu0
        %v582 = vpop.f32.mrb[0].mxu0
        %v583 = vadd.f32 0.0, %v582
        %v584 = vpop.f32.mrb[0].mxu0
        %585 = vmatprep.mubr.bf16.mxu0 0
        %586 = vmatmul.mubr.bf16.gmra.mrb[0].mxu0 %v522
        %v587 = vpop.f32.mrb[0].mxu0
        %v588 = vadd.f32 0.0, %v587
        %v589 = vpop.f32.mrb[0].mxu0
        %v590 = vpop.f32.mrb[0].mxu0
        %v591 = vadd.f32 0.0, %v590
        %v592 = vpop.f32.mrb[0].mxu0
        %593 = vmatprep.mubr.bf16.mxu0 0
        %594 = vmatmul.mubr.bf16.gmra.mrb[0].mxu0 %v525
        %v595 = vpop.f32.mrb[0].mxu0
        %v596 = vadd.f32 0.0, %v595
        %v597 = vpop.f32.mrb[0].mxu0
        %v598 = vpop.f32.mrb[0].mxu0
        %v599 = vadd.f32 0.0, %v598
        %v600 = vpop.f32.mrb[0].mxu0
        %601 = vmatprep.mubr.bf16.mxu0 0
        %602 = vmatmul.mubr.bf16.gmra.mrb[0].mxu0 %v528
        %v603 = vpop.f32.mrb[0].mxu0
        %v604 = vadd.f32 0.0, %v603
        %v605 = vpop.f32.mrb[0].mxu0
        %v606 = vpop.f32.mrb[0].mxu0
        %v607 = vadd.f32 0.0, %v606
        %v608 = vpop.f32.mrb[0].mxu0
        %609 = vmatprep.mubr.bf16.mxu0 0
        %610 = vmatmul.mubr.bf16.gmra.mrb[0].mxu0 %v531
        %v611 = vpop.f32.mrb[0].mxu0
        %v612 = vadd.f32 0.0, %v611
        %v613 = vpop.f32.mrb[0].mxu0
        %v614 = vpop.f32.mrb[0].mxu0
        %v615 = vadd.f32 0.0, %v614
        %v616 = vpop.f32.mrb[0].mxu0
        %617 = vmatprep.mubr.bf16.mxu0 0
        %618 = vmatmul.mubr.bf16.gmra.mrb[0].mxu0 %v534
        %v619 = vpop.f32.mrb[0].mxu0
        %v620 = vadd.f32 0.0, %v619
        %v621 = vpop.f32.mrb[0].mxu0
        %v622 = vpop.f32.mrb[0].mxu0
        %v623 = vadd.f32 0.0, %v622
        %v624 = vpop.f32.mrb[0].mxu0
        %625 = vmatprep.mubr.bf16.mxu0 0
        %626 = vmatmul.mubr.bf16.gmra.mrb[0].mxu0 %v537
        %v627 = vpop.f32.mrb[0].mxu0
        %v628 = vadd.f32 0.0, %v627
        %v629 = vpop.f32.mrb[0].mxu0
        %v630 = vpop.f32.mrb[0].mxu0
        %v631 = vadd.f32 0.0, %v630
        %v632 = vpop.f32.mrb[0].mxu0
        %633 = vmatprep.mubr.bf16.mxu0 0
        %634 = vmatmul.mubr.bf16.gmra.mrb[0].mxu0 %v540
        %v635 = vpop.f32.mrb[0].mxu0
        %v636 = vadd.f32 0.0, %v635
        %v637 = vpop.f32.mrb[0].mxu0
        %v638 = vpop.f32.mrb[0].mxu0
        %v639 = vadd.f32 0.0, %v638
        %v640 = vpop.f32.mrb[0].mxu0
        %641 = vdwg.mxu0
        %v642 = vadd.f32 %v430, %v580
        %v643 = vadd.f32 %v433, %v583
        %v644 = vadd.f32 %v438, %v588
        %v645 = vadd.f32 %v441, %v591
        %v646 = vadd.f32 %v446, %v596
        %v647 = vadd.f32 %v449, %v599
        %v648 = vadd.f32 %v454, %v604
        %v649 = vadd.f32 %v457, %v607
        %v650 = vadd.f32 %v462, %v612
        %v651 = vadd.f32 %v465, %v615
        %v652 = vadd.f32 %v470, %v620
        %v653 = vadd.f32 %v473, %v623
        %v654 = vadd.f32 %v478, %v628
        %v655 = vadd.f32 %v481, %v631
        %v656 = vadd.f32 %v486, %v636
        %v657 = vadd.f32 %v489, %v639
        %s658 = sadd.s32 %s185, 1
        %s659 = smul.u32 %s658, 24
        %s660 = scalar_lea.vmem %s182, %s659
        %v661 = vld [vmem:[%s660] sm:$0xff]
        %v662 = vld [vmem:[%s660 + $0x8] sm:$0xff]
        %v663 = vld [vmem:[%s660 + $0x18] sm:$0xff]
        %v664 = vld [vmem:[%s660 + $0x20] sm:$0xff]
        %v665 = vld [vmem:[%s660 + $0x30] sm:$0xff]
        %v666 = vld [vmem:[%s660 + $0x38] sm:$0xff]
        %v667 = vld [vmem:[%s660 + $0x48] sm:$0xff]
        %v668 = vld [vmem:[%s660 + $0x50] sm:$0xff]
        %v669 = vld [vmem:[%s660 + $0x60] sm:$0xff]
        %v670 = vld [vmem:[%s660 + $0x68] sm:$0xff]
        %v671 = vld [vmem:[%s660 + $0x78] sm:$0xff]
        %v672 = vld [vmem:[%s660 + $0x80] sm:$0xff]
        %v673 = vld [vmem:[%s660 + $0x90] sm:$0xff]
        %v674 = vld [vmem:[%s660 + $0x98] sm:$0xff]
        %v675 = vld [vmem:[%s660 + $0xa8] sm:$0xff]
        %v676 = vld [vmem:[%s660 + $0xb0] sm:$0xff]
        %v677 = vpack.c.bf16 %v662, %v661
        %v678 = vpack.c.bf16 %v664, %v663
        %v679 = vpack.c.bf16 %v666, %v665
        %v680 = vpack.c.bf16 %v668, %v667
        %v681 = vpack.c.bf16 %v670, %v669
        %v682 = vpack.c.bf16 %v672, %v671
        %v683 = vpack.c.bf16 %v674, %v673
        %v684 = vpack.c.bf16 %v676, %v675
        %s685 = scalar_lea.vmem %s1, 6
        %v686 = vld [vmem:[%s685] sm:$0x3]
        %v688 = vsel %vm239, %v677, 0
        %v691 = vsel %vm239, %v678, 0
        %v694 = vsel %vm239, %v679, 0
        %v697 = vsel %vm239, %v680, 0
        %v700 = vsel %vm239, %v681, 0
        %v703 = vsel %vm239, %v682, 0
        %v706 = vsel %vm239, %v683, 0
        %v709 = vsel %vm239, %v684, 0
        %v712 = vand.u32 %v686, %v267
        %714 = vmatprep.subr.bf16.mxu0 0
        %715 = vmatpush1.bf16.msra.mxu0 %v712
        %716 = vmatprep.subr.bf16.mxu0 0
        %717 = vmatpush1.bf16.msra.mxu0 0
        %718 = vmatprep.subr.bf16.mxu0 0
        %719 = vmatpush1.bf16.msra.mxu0 0
        %720 = vmatprep.subr.bf16.mxu0 0
        %721 = vmatpush1.bf16.msra.mxu0 0
        %722 = vmatprep.subr.bf16.mxu0 0
        %723 = vmatpush1.bf16.msra.mxu0 0
        %724 = vmatprep.subr.bf16.mxu0 0
        %725 = vmatpush1.bf16.msra.mxu0 0
        %726 = vmatprep.subr.bf16.mxu0 0
        %727 = vmatpush1.bf16.msra.mxu0 0
        %728 = vmatprep.subr.bf16.mxu0 0
        %729 = vmatpush1.bf16.msra.mxu0 0
        %730 = vmatprep.subr.bf16.mxu0 0
        %731 = vmatpush1.bf16.msra.mxu0 0
        %732 = vmatprep.subr.bf16.mxu0 0
        %733 = vmatpush1.bf16.msra.mxu0 0
        %734 = vmatprep.subr.bf16.mxu0 0
        %735 = vmatpush1.bf16.msra.mxu0 0
        %736 = vmatprep.subr.bf16.mxu0 0
        %737 = vmatpush1.bf16.msra.mxu0 0
        %738 = vmatprep.subr.bf16.mxu0 0
        %739 = vmatpush1.bf16.msra.mxu0 0
        %740 = vmatprep.subr.bf16.mxu0 0
        %741 = vmatpush1.bf16.msra.mxu0 0
        %742 = vmatprep.subr.bf16.mxu0 0
        %743 = vmatpush1.bf16.msra.mxu0 0
        %744 = vmatprep.subr.bf16.mxu0 0
        %745 = vmatpush1.bf16.msra.mxu0 0
        %746 = vmatprep.mubr.bf16.mxu0 0
        %747 = vmatmul.mubr.bf16.gmra.mrb[0].mxu0 %v688
        %v748 = vpop.f32.mrb[0].mxu0
        %v749 = vadd.f32 0.0, %v748
        %v750 = vpop.f32.mrb[0].mxu0
        %v751 = vpop.f32.mrb[0].mxu0
        %v752 = vadd.f32 0.0, %v751
        %v753 = vpop.f32.mrb[0].mxu0
        %754 = vmatprep.mubr.bf16.mxu0 0
        %755 = vmatmul.mubr.bf16.gmra.mrb[0].mxu0 %v691
        %v756 = vpop.f32.mrb[0].mxu0
        %v757 = vadd.f32 0.0, %v756
        %v758 = vpop.f32.mrb[0].mxu0
        %v759 = vpop.f32.mrb[0].mxu0
        %v760 = vadd.f32 0.0, %v759
        %v761 = vpop.f32.mrb[0].mxu0
        %762 = vmatprep.mubr.bf16.mxu0 0
        %763 = vmatmul.mubr.bf16.gmra.mrb[0].mxu0 %v694
        %v764 = vpop.f32.mrb[0].mxu0
        %v765 = vadd.f32 0.0, %v764
        %v766 = vpop.f32.mrb[0].mxu0
        %v767 = vpop.f32.mrb[0].mxu0
        %v768 = vadd.f32 0.0, %v767
        %v769 = vpop.f32.mrb[0].mxu0
        %770 = vmatprep.mubr.bf16.mxu0 0
        %771 = vmatmul.mubr.bf16.gmra.mrb[0].mxu0 %v697
        %v772 = vpop.f32.mrb[0].mxu0
        %v773 = vadd.f32 0.0, %v772
        %v774 = vpop.f32.mrb[0].mxu0
        %v775 = vpop.f32.mrb[0].mxu0
        %v776 = vadd.f32 0.0, %v775
        %v777 = vpop.f32.mrb[0].mxu0
        %778 = vmatprep.mubr.bf16.mxu0 0
        %779 = vmatmul.mubr.bf16.gmra.mrb[0].mxu0 %v700
        %v780 = vpop.f32.mrb[0].mxu0
        %v781 = vadd.f32 0.0, %v780
        %v782 = vpop.f32.mrb[0].mxu0
        %v783 = vpop.f32.mrb[0].mxu0
        %v784 = vadd.f32 0.0, %v783
        %v785 = vpop.f32.mrb[0].mxu0
        %786 = vmatprep.mubr.bf16.mxu0 0
        %787 = vmatmul.mubr.bf16.gmra.mrb[0].mxu0 %v703
        %v788 = vpop.f32.mrb[0].mxu0
        %v789 = vadd.f32 0.0, %v788
        %v790 = vpop.f32.mrb[0].mxu0
        %v791 = vpop.f32.mrb[0].mxu0
        %v792 = vadd.f32 0.0, %v791
        %v793 = vpop.f32.mrb[0].mxu0
        %794 = vmatprep.mubr.bf16.mxu0 0
        %795 = vmatmul.mubr.bf16.gmra.mrb[0].mxu0 %v706
        %v796 = vpop.f32.mrb[0].mxu0
        %v797 = vadd.f32 0.0, %v796
        %v798 = vpop.f32.mrb[0].mxu0
        %v799 = vpop.f32.mrb[0].mxu0
        %v800 = vadd.f32 0.0, %v799
        %v801 = vpop.f32.mrb[0].mxu0
        %802 = vmatprep.mubr.bf16.mxu0 0
        %803 = vmatmul.mubr.bf16.gmra.mrb[0].mxu0 %v709
        %v804 = vpop.f32.mrb[0].mxu0
        %v805 = vadd.f32 0.0, %v804
        %v806 = vpop.f32.mrb[0].mxu0
        %v807 = vpop.f32.mrb[0].mxu0
        %v808 = vadd.f32 0.0, %v807
        %v809 = vpop.f32.mrb[0].mxu0
        %810 = vdwg.mxu0
        %v811 = vadd.f32 %v642, %v749
        %v812 = vadd.f32 %v643, %v752
        %v813 = vadd.f32 %v644, %v757
        %v814 = vadd.f32 %v645, %v760
        %v815 = vadd.f32 %v646, %v765
        %v816 = vadd.f32 %v647, %v768
        %v817 = vadd.f32 %v648, %v773
        %v818 = vadd.f32 %v649, %v776
        %v819 = vadd.f32 %v650, %v781
        %v820 = vadd.f32 %v651, %v784
        %v821 = vadd.f32 %v652, %v789
        %v822 = vadd.f32 %v653, %v792
        %v823 = vadd.f32 %v654, %v797
        %v824 = vadd.f32 %v655, %v800
        %v825 = vadd.f32 %v656, %v805
        %v826 = vadd.f32 %v657, %v808
        %v827 = vld [vmem:[%s660 + $0x1] sm:$0xff]
        %v828 = vld [vmem:[%s660 + $0x9] sm:$0xff]
        %v829 = vld [vmem:[%s660 + $0x19] sm:$0xff]
        %v830 = vld [vmem:[%s660 + $0x21] sm:$0xff]
        %v831 = vld [vmem:[%s660 + $0x31] sm:$0xff]
        %v832 = vld [vmem:[%s660 + $0x39] sm:$0xff]
        %v833 = vld [vmem:[%s660 + $0x49] sm:$0xff]
        %v834 = vld [vmem:[%s660 + $0x51] sm:$0xff]
        %v835 = vld [vmem:[%s660 + $0x61] sm:$0xff]
        %v836 = vld [vmem:[%s660 + $0x69] sm:$0xff]
        %v837 = vld [vmem:[%s660 + $0x79] sm:$0xff]
        %v838 = vld [vmem:[%s660 + $0x81] sm:$0xff]
        %v839 = vld [vmem:[%s660 + $0x91] sm:$0xff]
        %v840 = vld [vmem:[%s660 + $0x99] sm:$0xff]
        %v841 = vld [vmem:[%s660 + $0xa9] sm:$0xff]
        %v842 = vld [vmem:[%s660 + $0xb1] sm:$0xff]
        %v843 = vpack.c.bf16 %v828, %v827
        %v844 = vpack.c.bf16 %v830, %v829
        %v845 = vpack.c.bf16 %v832, %v831
        %v846 = vpack.c.bf16 %v834, %v833
        %v847 = vpack.c.bf16 %v836, %v835
        %v848 = vpack.c.bf16 %v838, %v837
        %v849 = vpack.c.bf16 %v840, %v839
        %v850 = vpack.c.bf16 %v842, %v841
        %s851 = scalar_lea.vmem %s1, 8
        %v852 = vld [vmem:[%s851] sm:$0x3]
        %v854 = vsel %vm239, %v843, 0
        %v857 = vsel %vm239, %v844, 0
        %v860 = vsel %vm239, %v845, 0
        %v863 = vsel %vm239, %v846, 0
        %v866 = vsel %vm239, %v847, 0
        %v869 = vsel %vm239, %v848, 0
        %v872 = vsel %vm239, %v849, 0
        %v875 = vsel %vm239, %v850, 0
        %v878 = vand.u32 %v852, %v267
        %880 = vmatprep.subr.bf16.mxu0 0
        %881 = vmatpush1.bf16.msra.mxu0 %v878
        %882 = vmatprep.subr.bf16.mxu0 0
        %883 = vmatpush1.bf16.msra.mxu0 0
        %884 = vmatprep.subr.bf16.mxu0 0
        %885 = vmatpush1.bf16.msra.mxu0 0
        %886 = vmatprep.subr.bf16.mxu0 0
        %887 = vmatpush1.bf16.msra.mxu0 0
        %888 = vmatprep.subr.bf16.mxu0 0
        %889 = vmatpush1.bf16.msra.mxu0 0
        %890 = vmatprep.subr.bf16.mxu0 0
        %891 = vmatpush1.bf16.msra.mxu0 0
        %892 = vmatprep.subr.bf16.mxu0 0
        %893 = vmatpush1.bf16.msra.mxu0 0
        %894 = vmatprep.subr.bf16.mxu0 0
        %895 = vmatpush1.bf16.msra.mxu0 0
        %896 = vmatprep.subr.bf16.mxu0 0
        %897 = vmatpush1.bf16.msra.mxu0 0
        %898 = vmatprep.subr.bf16.mxu0 0
        %899 = vmatpush1.bf16.msra.mxu0 0
        %900 = vmatprep.subr.bf16.mxu0 0
        %901 = vmatpush1.bf16.msra.mxu0 0
        %902 = vmatprep.subr.bf16.mxu0 0
        %903 = vmatpush1.bf16.msra.mxu0 0
        %904 = vmatprep.subr.bf16.mxu0 0
        %905 = vmatpush1.bf16.msra.mxu0 0
        %906 = vmatprep.subr.bf16.mxu0 0
        %907 = vmatpush1.bf16.msra.mxu0 0
        %908 = vmatprep.subr.bf16.mxu0 0
        %909 = vmatpush1.bf16.msra.mxu0 0
        %910 = vmatprep.subr.bf16.mxu0 0
        %911 = vmatpush1.bf16.msra.mxu0 0
        %912 = vmatprep.mubr.bf16.mxu0 0
        %913 = vmatmul.mubr.bf16.gmra.mrb[0].mxu0 %v854
        %v914 = vpop.f32.mrb[0].mxu0
        %v915 = vadd.f32 0.0, %v914
        %v916 = vpop.f32.mrb[0].mxu0
        %v917 = vpop.f32.mrb[0].mxu0
        %v918 = vadd.f32 0.0, %v917
        %v919 = vpop.f32.mrb[0].mxu0
        %920 = vmatprep.mubr.bf16.mxu0 0
        %921 = vmatmul.mubr.bf16.gmra.mrb[0].mxu0 %v857
        %v922 = vpop.f32.mrb[0].mxu0
        %v923 = vadd.f32 0.0, %v922
        %v924 = vpop.f32.mrb[0].mxu0
        %v925 = vpop.f32.mrb[0].mxu0
        %v926 = vadd.f32 0.0, %v925
        %v927 = vpop.f32.mrb[0].mxu0
        %928 = vmatprep.mubr.bf16.mxu0 0
        %929 = vmatmul.mubr.bf16.gmra.mrb[0].mxu0 %v860
        %v930 = vpop.f32.mrb[0].mxu0
        %v931 = vadd.f32 0.0, %v930
        %v932 = vpop.f32.mrb[0].mxu0
        %v933 = vpop.f32.mrb[0].mxu0
        %v934 = vadd.f32 0.0, %v933
        %v935 = vpop.f32.mrb[0].mxu0
        %936 = vmatprep.mubr.bf16.mxu0 0
        %937 = vmatmul.mubr.bf16.gmra.mrb[0].mxu0 %v863
        %v938 = vpop.f32.mrb[0].mxu0
        %v939 = vadd.f32 0.0, %v938
        %v940 = vpop.f32.mrb[0].mxu0
        %v941 = vpop.f32.mrb[0].mxu0
        %v942 = vadd.f32 0.0, %v941
        %v943 = vpop.f32.mrb[0].mxu0
        %944 = vmatprep.mubr.bf16.mxu0 0
        %945 = vmatmul.mubr.bf16.gmra.mrb[0].mxu0 %v866
        %v946 = vpop.f32.mrb[0].mxu0
        %v947 = vadd.f32 0.0, %v946
        %v948 = vpop.f32.mrb[0].mxu0
        %v949 = vpop.f32.mrb[0].mxu0
        %v950 = vadd.f32 0.0, %v949
        %v951 = vpop.f32.mrb[0].mxu0
        %952 = vmatprep.mubr.bf16.mxu0 0
        %953 = vmatmul.mubr.bf16.gmra.mrb[0].mxu0 %v869
        %v954 = vpop.f32.mrb[0].mxu0
        %v955 = vadd.f32 0.0, %v954
        %v956 = vpop.f32.mrb[0].mxu0
        %v957 = vpop.f32.mrb[0].mxu0
        %v958 = vadd.f32 0.0, %v957
        %v959 = vpop.f32.mrb[0].mxu0
        %960 = vmatprep.mubr.bf16.mxu0 0
        %961 = vmatmul.mubr.bf16.gmra.mrb[0].mxu0 %v872
        %v962 = vpop.f32.mrb[0].mxu0
        %v963 = vadd.f32 0.0, %v962
        %v964 = vpop.f32.mrb[0].mxu0
        %v965 = vpop.f32.mrb[0].mxu0
        %v966 = vadd.f32 0.0, %v965
        %v967 = vpop.f32.mrb[0].mxu0
        %968 = vmatprep.mubr.bf16.mxu0 0
        %969 = vmatmul.mubr.bf16.gmra.mrb[0].mxu0 %v875
        %v970 = vpop.f32.mrb[0].mxu0
        %v971 = vadd.f32 0.0, %v970
        %v972 = vpop.f32.mrb[0].mxu0
        %v973 = vpop.f32.mrb[0].mxu0
        %v974 = vadd.f32 0.0, %v973
        %v975 = vpop.f32.mrb[0].mxu0
        %976 = vdwg.mxu0
        %v977 = vadd.f32 %v811, %v915
        %v978 = vadd.f32 %v812, %v918
        %v979 = vadd.f32 %v813, %v923
        %v980 = vadd.f32 %v814, %v926
        %v981 = vadd.f32 %v815, %v931
        %v982 = vadd.f32 %v816, %v934
        %v983 = vadd.f32 %v817, %v939
        %v984 = vadd.f32 %v818, %v942
        %v985 = vadd.f32 %v819, %v947
        %v986 = vadd.f32 %v820, %v950
        %v987 = vadd.f32 %v821, %v955
        %v988 = vadd.f32 %v822, %v958
        %v989 = vadd.f32 %v823, %v963
        %v990 = vadd.f32 %v824, %v966
        %v991 = vadd.f32 %v825, %v971
        %v992 = vadd.f32 %v826, %v974
        %v993 = vld [vmem:[%s660 + $0x2] sm:$0xff]
        %v994 = vld [vmem:[%s660 + $0xa] sm:$0xff]
        %v995 = vld [vmem:[%s660 + $0x1a] sm:$0xff]
        %v996 = vld [vmem:[%s660 + $0x22] sm:$0xff]
        %v997 = vld [vmem:[%s660 + $0x32] sm:$0xff]
        %v998 = vld [vmem:[%s660 + $0x3a] sm:$0xff]
        %v999 = vld [vmem:[%s660 + $0x4a] sm:$0xff]
        %v1000 = vld [vmem:[%s660 + $0x52] sm:$0xff]
        %v1001 = vld [vmem:[%s660 + $0x62] sm:$0xff]
        %v1002 = vld [vmem:[%s660 + $0x6a] sm:$0xff]
        %v1003 = vld [vmem:[%s660 + $0x7a] sm:$0xff]
        %v1004 = vld [vmem:[%s660 + $0x82] sm:$0xff]
        %v1005 = vld [vmem:[%s660 + $0x92] sm:$0xff]
        %v1006 = vld [vmem:[%s660 + $0x9a] sm:$0xff]
        %v1007 = vld [vmem:[%s660 + $0xaa] sm:$0xff]
        %v1008 = vld [vmem:[%s660 + $0xb2] sm:$0xff]
        %v1009 = vpack.c.bf16 %v994, %v993
        %v1010 = vpack.c.bf16 %v996, %v995
        %v1011 = vpack.c.bf16 %v998, %v997
        %v1012 = vpack.c.bf16 %v1000, %v999
        %v1013 = vpack.c.bf16 %v1002, %v1001
        %v1014 = vpack.c.bf16 %v1004, %v1003
        %v1015 = vpack.c.bf16 %v1006, %v1005
        %v1016 = vpack.c.bf16 %v1008, %v1007
        %s1017 = scalar_lea.vmem %s1, 10
        %v1018 = vld [vmem:[%s1017] sm:$0x3]
        %v1020 = vsel %vm239, %v1009, 0
        %v1023 = vsel %vm239, %v1010, 0
        %v1026 = vsel %vm239, %v1011, 0
        %v1029 = vsel %vm239, %v1012, 0
        %v1032 = vsel %vm239, %v1013, 0
        %v1035 = vsel %vm239, %v1014, 0
        %v1038 = vsel %vm239, %v1015, 0
        %v1041 = vsel %vm239, %v1016, 0
        %v1044 = vand.u32 %v1018, %v267
        %1046 = vmatprep.subr.bf16.mxu0 0
        %1047 = vmatpush1.bf16.msra.mxu0 %v1044
        %1048 = vmatprep.subr.bf16.mxu0 0
        %1049 = vmatpush1.bf16.msra.mxu0 0
        %1050 = vmatprep.subr.bf16.mxu0 0
        %1051 = vmatpush1.bf16.msra.mxu0 0
        %1052 = vmatprep.subr.bf16.mxu0 0
        %1053 = vmatpush1.bf16.msra.mxu0 0
        %1054 = vmatprep.subr.bf16.mxu0 0
        %1055 = vmatpush1.bf16.msra.mxu0 0
        %1056 = vmatprep.subr.bf16.mxu0 0
        %1057 = vmatpush1.bf16.msra.mxu0 0
        %1058 = vmatprep.subr.bf16.mxu0 0
        %1059 = vmatpush1.bf16.msra.mxu0 0
        %1060 = vmatprep.subr.bf16.mxu0 0
        %1061 = vmatpush1.bf16.msra.mxu0 0
        %1062 = vmatprep.subr.bf16.mxu0 0
        %1063 = vmatpush1.bf16.msra.mxu0 0
        %1064 = vmatprep.subr.bf16.mxu0 0
        %1065 = vmatpush1.bf16.msra.mxu0 0
        %1066 = vmatprep.subr.bf16.mxu0 0
        %1067 = vmatpush1.bf16.msra.mxu0 0
        %1068 = vmatprep.subr.bf16.mxu0 0
        %1069 = vmatpush1.bf16.msra.mxu0 0
        %1070 = vmatprep.subr.bf16.mxu0 0
        %1071 = vmatpush1.bf16.msra.mxu0 0
        %1072 = vmatprep.subr.bf16.mxu0 0
        %1073 = vmatpush1.bf16.msra.mxu0 0
        %1074 = vmatprep.subr.bf16.mxu0 0
        %1075 = vmatpush1.bf16.msra.mxu0 0
        %1076 = vmatprep.subr.bf16.mxu0 0
        %1077 = vmatpush1.bf16.msra.mxu0 0
        %1078 = vmatprep.mubr.bf16.mxu0 0
        %1079 = vmatmul.mubr.bf16.gmra.mrb[0].mxu0 %v1020
        %v1080 = vpop.f32.mrb[0].mxu0
        %v1081 = vadd.f32 0.0, %v1080
        %v1082 = vpop.f32.mrb[0].mxu0
        %v1083 = vpop.f32.mrb[0].mxu0
        %v1084 = vadd.f32 0.0, %v1083
        %v1085 = vpop.f32.mrb[0].mxu0
        %1086 = vmatprep.mubr.bf16.mxu0 0
        %1087 = vmatmul.mubr.bf16.gmra.mrb[0].mxu0 %v1023
        %v1088 = vpop.f32.mrb[0].mxu0
        %v1089 = vadd.f32 0.0, %v1088
        %v1090 = vpop.f32.mrb[0].mxu0
        %v1091 = vpop.f32.mrb[0].mxu0
        %v1092 = vadd.f32 0.0, %v1091
        %v1093 = vpop.f32.mrb[0].mxu0
        %1094 = vmatprep.mubr.bf16.mxu0 0
        %1095 = vmatmul.mubr.bf16.gmra.mrb[0].mxu0 %v1026
        %v1096 = vpop.f32.mrb[0].mxu0
        %v1097 = vadd.f32 0.0, %v1096
        %v1098 = vpop.f32.mrb[0].mxu0
        %v1099 = vpop.f32.mrb[0].mxu0
        %v1100 = vadd.f32 0.0, %v1099
        %v1101 = vpop.f32.mrb[0].mxu0
        %1102 = vmatprep.mubr.bf16.mxu0 0
        %1103 = vmatmul.mubr.bf16.gmra.mrb[0].mxu0 %v1029
        %v1104 = vpop.f32.mrb[0].mxu0
        %v1105 = vadd.f32 0.0, %v1104
        %v1106 = vpop.f32.mrb[0].mxu0
        %v1107 = vpop.f32.mrb[0].mxu0
        %v1108 = vadd.f32 0.0, %v1107
        %v1109 = vpop.f32.mrb[0].mxu0
        %1110 = vmatprep.mubr.bf16.mxu0 0
        %1111 = vmatmul.mubr.bf16.gmra.mrb[0].mxu0 %v1032
        %v1112 = vpop.f32.mrb[0].mxu0
        %v1113 = vadd.f32 0.0, %v1112
        %v1114 = vpop.f32.mrb[0].mxu0
        %v1115 = vpop.f32.mrb[0].mxu0
        %v1116 = vadd.f32 0.0, %v1115
        %v1117 = vpop.f32.mrb[0].mxu0
        %1118 = vmatprep.mubr.bf16.mxu0 0
        %1119 = vmatmul.mubr.bf16.gmra.mrb[0].mxu0 %v1035
        %v1120 = vpop.f32.mrb[0].mxu0
        %v1121 = vadd.f32 0.0, %v1120
        %v1122 = vpop.f32.mrb[0].mxu0
        %v1123 = vpop.f32.mrb[0].mxu0
        %v1124 = vadd.f32 0.0, %v1123
        %v1125 = vpop.f32.mrb[0].mxu0
        %1126 = vmatprep.mubr.bf16.mxu0 0
        %1127 = vmatmul.mubr.bf16.gmra.mrb[0].mxu0 %v1038
        %v1128 = vpop.f32.mrb[0].mxu0
        %v1129 = vadd.f32 0.0, %v1128
        %v1130 = vpop.f32.mrb[0].mxu0
        %v1131 = vpop.f32.mrb[0].mxu0
        %v1132 = vadd.f32 0.0, %v1131
        %v1133 = vpop.f32.mrb[0].mxu0
        %1134 = vmatprep.mubr.bf16.mxu0 0
        %1135 = vmatmul.mubr.bf16.gmra.mrb[0].mxu0 %v1041
        %v1136 = vpop.f32.mrb[0].mxu0
        %v1137 = vadd.f32 0.0, %v1136
        %v1138 = vpop.f32.mrb[0].mxu0
        %v1139 = vpop.f32.mrb[0].mxu0
        %v1140 = vadd.f32 0.0, %v1139
        %v1141 = vpop.f32.mrb[0].mxu0
        %1142 = vdwg.mxu0
        %v1143 = vadd.f32 %v977, %v1081
        %v1144 = vadd.f32 %v978, %v1084
        %v1145 = vadd.f32 %v979, %v1089
        %v1146 = vadd.f32 %v980, %v1092
        %v1147 = vadd.f32 %v981, %v1097
        %v1148 = vadd.f32 %v982, %v1100
        %v1149 = vadd.f32 %v983, %v1105
        %v1150 = vadd.f32 %v984, %v1108
        %v1151 = vadd.f32 %v985, %v1113
        %v1152 = vadd.f32 %v986, %v1116
        %v1153 = vadd.f32 %v987, %v1121
        %v1154 = vadd.f32 %v988, %v1124
        %v1155 = vadd.f32 %v989, %v1129
        %v1156 = vadd.f32 %v990, %v1132
        %v1157 = vadd.f32 %v991, %v1137
        %v1158 = vadd.f32 %v992, %v1140
        %s1159 = sadd.s32 %s185, 2
        %s1160 = smul.u32 %s1159, 24
        %s1161 = scalar_lea.vmem %s182, %s1160
        %v1162 = vld [vmem:[%s1161] sm:$0xff]
        %v1163 = vld [vmem:[%s1161 + $0x8] sm:$0xff]
        %v1164 = vld [vmem:[%s1161 + $0x18] sm:$0xff]
        %v1165 = vld [vmem:[%s1161 + $0x20] sm:$0xff]
        %v1166 = vld [vmem:[%s1161 + $0x30] sm:$0xff]
        %v1167 = vld [vmem:[%s1161 + $0x38] sm:$0xff]
        %v1168 = vld [vmem:[%s1161 + $0x48] sm:$0xff]
        %v1169 = vld [vmem:[%s1161 + $0x50] sm:$0xff]
        %v1170 = vld [vmem:[%s1161 + $0x60] sm:$0xff]
        %v1171 = vld [vmem:[%s1161 + $0x68] sm:$0xff]
        %v1172 = vld [vmem:[%s1161 + $0x78] sm:$0xff]
        %v1173 = vld [vmem:[%s1161 + $0x80] sm:$0xff]
        %v1174 = vld [vmem:[%s1161 + $0x90] sm:$0xff]
        %v1175 = vld [vmem:[%s1161 + $0x98] sm:$0xff]
        %v1176 = vld [vmem:[%s1161 + $0xa8] sm:$0xff]
        %v1177 = vld [vmem:[%s1161 + $0xb0] sm:$0xff]
        %v1178 = vpack.c.bf16 %v1163, %v1162
        %v1179 = vpack.c.bf16 %v1165, %v1164
        %v1180 = vpack.c.bf16 %v1167, %v1166
        %v1181 = vpack.c.bf16 %v1169, %v1168
        %v1182 = vpack.c.bf16 %v1171, %v1170
        %v1183 = vpack.c.bf16 %v1173, %v1172
        %v1184 = vpack.c.bf16 %v1175, %v1174
        %v1185 = vpack.c.bf16 %v1177, %v1176
        %s1186 = scalar_lea.vmem %s1, 12
        %v1187 = vld [vmem:[%s1186] sm:$0x3]
        %v1189 = vsel %vm239, %v1178, 0
        %v1192 = vsel %vm239, %v1179, 0
        %v1195 = vsel %vm239, %v1180, 0
        %v1198 = vsel %vm239, %v1181, 0
        %v1201 = vsel %vm239, %v1182, 0
        %v1204 = vsel %vm239, %v1183, 0
        %v1207 = vsel %vm239, %v1184, 0
        %v1210 = vsel %vm239, %v1185, 0
        %v1213 = vand.u32 %v1187, %v267
        %1215 = vmatprep.subr.bf16.mxu0 0
        %1216 = vmatpush1.bf16.msra.mxu0 %v1213
        %1217 = vmatprep.subr.bf16.mxu0 0
        %1218 = vmatpush1.bf16.msra.mxu0 0
        %1219 = vmatprep.subr.bf16.mxu0 0
        %1220 = vmatpush1.bf16.msra.mxu0 0
        %1221 = vmatprep.subr.bf16.mxu0 0
        %1222 = vmatpush1.bf16.msra.mxu0 0
        %1223 = vmatprep.subr.bf16.mxu0 0
        %1224 = vmatpush1.bf16.msra.mxu0 0
        %1225 = vmatprep.subr.bf16.mxu0 0
        %1226 = vmatpush1.bf16.msra.mxu0 0
        %1227 = vmatprep.subr.bf16.mxu0 0
        %1228 = vmatpush1.bf16.msra.mxu0 0
        %1229 = vmatprep.subr.bf16.mxu0 0
        %1230 = vmatpush1.bf16.msra.mxu0 0
        %1231 = vmatprep.subr.bf16.mxu0 0
        %1232 = vmatpush1.bf16.msra.mxu0 0
        %1233 = vmatprep.subr.bf16.mxu0 0
        %1234 = vmatpush1.bf16.msra.mxu0 0
        %1235 = vmatprep.subr.bf16.mxu0 0
        %1236 = vmatpush1.bf16.msra.mxu0 0
        %1237 = vmatprep.subr.bf16.mxu0 0
        %1238 = vmatpush1.bf16.msra.mxu0 0
        %1239 = vmatprep.subr.bf16.mxu0 0
        %1240 = vmatpush1.bf16.msra.mxu0 0
        %1241 = vmatprep.subr.bf16.mxu0 0
        %1242 = vmatpush1.bf16.msra.mxu0 0
        %1243 = vmatprep.subr.bf16.mxu0 0
        %1244 = vmatpush1.bf16.msra.mxu0 0
        %1245 = vmatprep.subr.bf16.mxu0 0
        %1246 = vmatpush1.bf16.msra.mxu0 0
        %1247 = vmatprep.mubr.bf16.mxu0 0
        %1248 = vmatmul.mubr.bf16.gmra.mrb[0].mxu0 %v1189
        %v1249 = vpop.f32.mrb[0].mxu0
        %v1250 = vadd.f32 0.0, %v1249
        %v1251 = vpop.f32.mrb[0].mxu0
        %v1252 = vpop.f32.mrb[0].mxu0
        %v1253 = vadd.f32 0.0, %v1252
        %v1254 = vpop.f32.mrb[0].mxu0
        %1255 = vmatprep.mubr.bf16.mxu0 0
        %1256 = vmatmul.mubr.bf16.gmra.mrb[0].mxu0 %v1192
        %v1257 = vpop.f32.mrb[0].mxu0
        %v1258 = vadd.f32 0.0, %v1257
        %v1259 = vpop.f32.mrb[0].mxu0
        %v1260 = vpop.f32.mrb[0].mxu0
        %v1261 = vadd.f32 0.0, %v1260
        %v1262 = vpop.f32.mrb[0].mxu0
        %1263 = vmatprep.mubr.bf16.mxu0 0
        %1264 = vmatmul.mubr.bf16.gmra.mrb[0].mxu0 %v1195
        %v1265 = vpop.f32.mrb[0].mxu0
        %v1266 = vadd.f32 0.0, %v1265
        %v1267 = vpop.f32.mrb[0].mxu0
        %v1268 = vpop.f32.mrb[0].mxu0
        %v1269 = vadd.f32 0.0, %v1268
        %v1270 = vpop.f32.mrb[0].mxu0
        %1271 = vmatprep.mubr.bf16.mxu0 0
        %1272 = vmatmul.mubr.bf16.gmra.mrb[0].mxu0 %v1198
        %v1273 = vpop.f32.mrb[0].mxu0
        %v1274 = vadd.f32 0.0, %v1273
        %v1275 = vpop.f32.mrb[0].mxu0
        %v1276 = vpop.f32.mrb[0].mxu0
        %v1277 = vadd.f32 0.0, %v1276
        %v1278 = vpop.f32.mrb[0].mxu0
        %1279 = vmatprep.mubr.bf16.mxu0 0
        %1280 = vmatmul.mubr.bf16.gmra.mrb[0].mxu0 %v1201
        %v1281 = vpop.f32.mrb[0].mxu0
        %v1282 = vadd.f32 0.0, %v1281
        %v1283 = vpop.f32.mrb[0].mxu0
        %v1284 = vpop.f32.mrb[0].mxu0
        %v1285 = vadd.f32 0.0, %v1284
        %v1286 = vpop.f32.mrb[0].mxu0
        %1287 = vmatprep.mubr.bf16.mxu0 0
        %1288 = vmatmul.mubr.bf16.gmra.mrb[0].mxu0 %v1204
        %v1289 = vpop.f32.mrb[0].mxu0
        %v1290 = vadd.f32 0.0, %v1289
        %v1291 = vpop.f32.mrb[0].mxu0
        %v1292 = vpop.f32.mrb[0].mxu0
        %v1293 = vadd.f32 0.0, %v1292
        %v1294 = vpop.f32.mrb[0].mxu0
        %1295 = vmatprep.mubr.bf16.mxu0 0
        %1296 = vmatmul.mubr.bf16.gmra.mrb[0].mxu0 %v1207
        %v1297 = vpop.f32.mrb[0].mxu0
        %v1298 = vadd.f32 0.0, %v1297
        %v1299 = vpop.f32.mrb[0].mxu0
        %v1300 = vpop.f32.mrb[0].mxu0
        %v1301 = vadd.f32 0.0, %v1300
        %v1302 = vpop.f32.mrb[0].mxu0
        %1303 = vmatprep.mubr.bf16.mxu0 0
        %1304 = vmatmul.mubr.bf16.gmra.mrb[0].mxu0 %v1210
        %v1305 = vpop.f32.mrb[0].mxu0
        %v1306 = vadd.f32 0.0, %v1305
        %v1307 = vpop.f32.mrb[0].mxu0
        %v1308 = vpop.f32.mrb[0].mxu0
        %v1309 = vadd.f32 0.0, %v1308
        %v1310 = vpop.f32.mrb[0].mxu0
        %1311 = vdwg.mxu0
        %v1312 = vadd.f32 %v1143, %v1250
        %v1313 = vadd.f32 %v1144, %v1253
        %v1314 = vadd.f32 %v1145, %v1258
        %v1315 = vadd.f32 %v1146, %v1261
        %v1316 = vadd.f32 %v1147, %v1266
        %v1317 = vadd.f32 %v1148, %v1269
        %v1318 = vadd.f32 %v1149, %v1274
        %v1319 = vadd.f32 %v1150, %v1277
        %v1320 = vadd.f32 %v1151, %v1282
        %v1321 = vadd.f32 %v1152, %v1285
        %v1322 = vadd.f32 %v1153, %v1290
        %v1323 = vadd.f32 %v1154, %v1293
        %v1324 = vadd.f32 %v1155, %v1298
        %v1325 = vadd.f32 %v1156, %v1301
        %v1326 = vadd.f32 %v1157, %v1306
        %v1327 = vadd.f32 %v1158, %v1309
        %v1328 = vld [vmem:[%s1161 + $0x1] sm:$0xff]
        %v1329 = vld [vmem:[%s1161 + $0x9] sm:$0xff]
        %v1330 = vld [vmem:[%s1161 + $0x19] sm:$0xff]
        %v1331 = vld [vmem:[%s1161 + $0x21] sm:$0xff]
        %v1332 = vld [vmem:[%s1161 + $0x31] sm:$0xff]
        %v1333 = vld [vmem:[%s1161 + $0x39] sm:$0xff]
        %v1334 = vld [vmem:[%s1161 + $0x49] sm:$0xff]
        %v1335 = vld [vmem:[%s1161 + $0x51] sm:$0xff]
        %v1336 = vld [vmem:[%s1161 + $0x61] sm:$0xff]
        %v1337 = vld [vmem:[%s1161 + $0x69] sm:$0xff]
        %v1338 = vld [vmem:[%s1161 + $0x79] sm:$0xff]
        %v1339 = vld [vmem:[%s1161 + $0x81] sm:$0xff]
        %v1340 = vld [vmem:[%s1161 + $0x91] sm:$0xff]
        %v1341 = vld [vmem:[%s1161 + $0x99] sm:$0xff]
        %v1342 = vld [vmem:[%s1161 + $0xa9] sm:$0xff]
        %v1343 = vld [vmem:[%s1161 + $0xb1] sm:$0xff]
        %v1344 = vpack.c.bf16 %v1329, %v1328
        %v1345 = vpack.c.bf16 %v1331, %v1330
        %v1346 = vpack.c.bf16 %v1333, %v1332
        %v1347 = vpack.c.bf16 %v1335, %v1334
        %v1348 = vpack.c.bf16 %v1337, %v1336
        %v1349 = vpack.c.bf16 %v1339, %v1338
        %v1350 = vpack.c.bf16 %v1341, %v1340
        %v1351 = vpack.c.bf16 %v1343, %v1342
        %s1352 = scalar_lea.vmem %s1, 14
        %v1353 = vld [vmem:[%s1352] sm:$0x3]
        %v1355 = vsel %vm239, %v1344, 0
        %v1358 = vsel %vm239, %v1345, 0
        %v1361 = vsel %vm239, %v1346, 0
        %v1364 = vsel %vm239, %v1347, 0
        %v1367 = vsel %vm239, %v1348, 0
        %v1370 = vsel %vm239, %v1349, 0
        %v1373 = vsel %vm239, %v1350, 0
        %v1376 = vsel %vm239, %v1351, 0
        %v1379 = vand.u32 %v1353, %v267
        %1381 = vmatprep.subr.bf16.mxu0 0
        %1382 = vmatpush1.bf16.msra.mxu0 %v1379
        %1383 = vmatprep.subr.bf16.mxu0 0
        %1384 = vmatpush1.bf16.msra.mxu0 0
        %1385 = vmatprep.subr.bf16.mxu0 0
        %1386 = vmatpush1.bf16.msra.mxu0 0
        %1387 = vmatprep.subr.bf16.mxu0 0
        %1388 = vmatpush1.bf16.msra.mxu0 0
        %1389 = vmatprep.subr.bf16.mxu0 0
        %1390 = vmatpush1.bf16.msra.mxu0 0
        %1391 = vmatprep.subr.bf16.mxu0 0
        %1392 = vmatpush1.bf16.msra.mxu0 0
        %1393 = vmatprep.subr.bf16.mxu0 0
        %1394 = vmatpush1.bf16.msra.mxu0 0
        %1395 = vmatprep.subr.bf16.mxu0 0
        %1396 = vmatpush1.bf16.msra.mxu0 0
        %1397 = vmatprep.subr.bf16.mxu0 0
        %1398 = vmatpush1.bf16.msra.mxu0 0
        %1399 = vmatprep.subr.bf16.mxu0 0
        %1400 = vmatpush1.bf16.msra.mxu0 0
        %1401 = vmatprep.subr.bf16.mxu0 0
        %1402 = vmatpush1.bf16.msra.mxu0 0
        %1403 = vmatprep.subr.bf16.mxu0 0
        %1404 = vmatpush1.bf16.msra.mxu0 0
        %1405 = vmatprep.subr.bf16.mxu0 0
        %1406 = vmatpush1.bf16.msra.mxu0 0
        %1407 = vmatprep.subr.bf16.mxu0 0
        %1408 = vmatpush1.bf16.msra.mxu0 0
        %1409 = vmatprep.subr.bf16.mxu0 0
        %1410 = vmatpush1.bf16.msra.mxu0 0
        %1411 = vmatprep.subr.bf16.mxu0 0
        %1412 = vmatpush1.bf16.msra.mxu0 0
        %1413 = vmatprep.mubr.bf16.mxu0 0
        %1414 = vmatmul.mubr.bf16.gmra.mrb[0].mxu0 %v1355
        %v1415 = vpop.f32.mrb[0].mxu0
        %v1416 = vadd.f32 0.0, %v1415
        %v1417 = vpop.f32.mrb[0].mxu0
        %v1418 = vpop.f32.mrb[0].mxu0
        %v1419 = vadd.f32 0.0, %v1418
        %v1420 = vpop.f32.mrb[0].mxu0
        %1421 = vmatprep.mubr.bf16.mxu0 0
        %1422 = vmatmul.mubr.bf16.gmra.mrb[0].mxu0 %v1358
        %v1423 = vpop.f32.mrb[0].mxu0
        %v1424 = vadd.f32 0.0, %v1423
        %v1425 = vpop.f32.mrb[0].mxu0
        %v1426 = vpop.f32.mrb[0].mxu0
        %v1427 = vadd.f32 0.0, %v1426
        %v1428 = vpop.f32.mrb[0].mxu0
        %1429 = vmatprep.mubr.bf16.mxu0 0
        %1430 = vmatmul.mubr.bf16.gmra.mrb[0].mxu0 %v1361
        %v1431 = vpop.f32.mrb[0].mxu0
        %v1432 = vadd.f32 0.0, %v1431
        %v1433 = vpop.f32.mrb[0].mxu0
        %v1434 = vpop.f32.mrb[0].mxu0
        %v1435 = vadd.f32 0.0, %v1434
        %v1436 = vpop.f32.mrb[0].mxu0
        %1437 = vmatprep.mubr.bf16.mxu0 0
        %1438 = vmatmul.mubr.bf16.gmra.mrb[0].mxu0 %v1364
        %v1439 = vpop.f32.mrb[0].mxu0
        %v1440 = vadd.f32 0.0, %v1439
        %v1441 = vpop.f32.mrb[0].mxu0
        %v1442 = vpop.f32.mrb[0].mxu0
        %v1443 = vadd.f32 0.0, %v1442
        %v1444 = vpop.f32.mrb[0].mxu0
        %1445 = vmatprep.mubr.bf16.mxu0 0
        %1446 = vmatmul.mubr.bf16.gmra.mrb[0].mxu0 %v1367
        %v1447 = vpop.f32.mrb[0].mxu0
        %v1448 = vadd.f32 0.0, %v1447
        %v1449 = vpop.f32.mrb[0].mxu0
        %v1450 = vpop.f32.mrb[0].mxu0
        %v1451 = vadd.f32 0.0, %v1450
        %v1452 = vpop.f32.mrb[0].mxu0
        %1453 = vmatprep.mubr.bf16.mxu0 0
        %1454 = vmatmul.mubr.bf16.gmra.mrb[0].mxu0 %v1370
        %v1455 = vpop.f32.mrb[0].mxu0
        %v1456 = vadd.f32 0.0, %v1455
        %v1457 = vpop.f32.mrb[0].mxu0
        %v1458 = vpop.f32.mrb[0].mxu0
        %v1459 = vadd.f32 0.0, %v1458
        %v1460 = vpop.f32.mrb[0].mxu0
        %1461 = vmatprep.mubr.bf16.mxu0 0
        %1462 = vmatmul.mubr.bf16.gmra.mrb[0].mxu0 %v1373
        %v1463 = vpop.f32.mrb[0].mxu0
        %v1464 = vadd.f32 0.0, %v1463
        %v1465 = vpop.f32.mrb[0].mxu0
        %v1466 = vpop.f32.mrb[0].mxu0
        %v1467 = vadd.f32 0.0, %v1466
        %v1468 = vpop.f32.mrb[0].mxu0
        %1469 = vmatprep.mubr.bf16.mxu0 0
        %1470 = vmatmul.mubr.bf16.gmra.mrb[0].mxu0 %v1376
        %v1471 = vpop.f32.mrb[0].mxu0
        %v1472 = vadd.f32 0.0, %v1471
        %v1473 = vpop.f32.mrb[0].mxu0
        %v1474 = vpop.f32.mrb[0].mxu0
        %v1475 = vadd.f32 0.0, %v1474
        %v1476 = vpop.f32.mrb[0].mxu0
        %1477 = vdwg.mxu0
        %v1478 = vadd.f32 %v1312, %v1416
        %v1479 = vadd.f32 %v1313, %v1419
        %v1480 = vadd.f32 %v1314, %v1424
        %v1481 = vadd.f32 %v1315, %v1427
        %v1482 = vadd.f32 %v1316, %v1432
        %v1483 = vadd.f32 %v1317, %v1435
        %v1484 = vadd.f32 %v1318, %v1440
        %v1485 = vadd.f32 %v1319, %v1443
        %v1486 = vadd.f32 %v1320, %v1448
        %v1487 = vadd.f32 %v1321, %v1451
        %v1488 = vadd.f32 %v1322, %v1456
        %v1489 = vadd.f32 %v1323, %v1459
        %v1490 = vadd.f32 %v1324, %v1464
        %v1491 = vadd.f32 %v1325, %v1467
        %v1492 = vadd.f32 %v1326, %v1472
        %v1493 = vadd.f32 %v1327, %v1475
        %v1494 = vld [vmem:[%s1161 + $0x2] sm:$0xff]
        %v1495 = vld [vmem:[%s1161 + $0xa] sm:$0xff]
        %v1496 = vld [vmem:[%s1161 + $0x1a] sm:$0xff]
        %v1497 = vld [vmem:[%s1161 + $0x22] sm:$0xff]
        %v1498 = vld [vmem:[%s1161 + $0x32] sm:$0xff]
        %v1499 = vld [vmem:[%s1161 + $0x3a] sm:$0xff]
        %v1500 = vld [vmem:[%s1161 + $0x4a] sm:$0xff]
        %v1501 = vld [vmem:[%s1161 + $0x52] sm:$0xff]
        %v1502 = vld [vmem:[%s1161 + $0x62] sm:$0xff]
        %v1503 = vld [vmem:[%s1161 + $0x6a] sm:$0xff]
        %v1504 = vld [vmem:[%s1161 + $0x7a] sm:$0xff]
        %v1505 = vld [vmem:[%s1161 + $0x82] sm:$0xff]
        %v1506 = vld [vmem:[%s1161 + $0x92] sm:$0xff]
        %v1507 = vld [vmem:[%s1161 + $0x9a] sm:$0xff]
        %v1508 = vld [vmem:[%s1161 + $0xaa] sm:$0xff]
        %v1509 = vld [vmem:[%s1161 + $0xb2] sm:$0xff]
        %v1510 = vpack.c.bf16 %v1495, %v1494
        %v1511 = vpack.c.bf16 %v1497, %v1496
        %v1512 = vpack.c.bf16 %v1499, %v1498
        %v1513 = vpack.c.bf16 %v1501, %v1500
        %v1514 = vpack.c.bf16 %v1503, %v1502
        %v1515 = vpack.c.bf16 %v1505, %v1504
        %v1516 = vpack.c.bf16 %v1507, %v1506
        %v1517 = vpack.c.bf16 %v1509, %v1508
        %s1518 = scalar_lea.vmem %s1, 16
        %v1519 = vld [vmem:[%s1518] sm:$0x3]
        %v1521 = vsel %vm239, %v1510, 0
        %v1524 = vsel %vm239, %v1511, 0
        %v1527 = vsel %vm239, %v1512, 0
        %v1530 = vsel %vm239, %v1513, 0
        %v1533 = vsel %vm239, %v1514, 0
        %v1536 = vsel %vm239, %v1515, 0
        %v1539 = vsel %vm239, %v1516, 0
        %v1542 = vsel %vm239, %v1517, 0
        %v1545 = vand.u32 %v1519, %v267
        %1547 = vmatprep.subr.bf16.mxu0 0
        %1548 = vmatpush1.bf16.msra.mxu0 %v1545
        %1549 = vmatprep.subr.bf16.mxu0 0
        %1550 = vmatpush1.bf16.msra.mxu0 0
        %1551 = vmatprep.subr.bf16.mxu0 0
        %1552 = vmatpush1.bf16.msra.mxu0 0
        %1553 = vmatprep.subr.bf16.mxu0 0
        %1554 = vmatpush1.bf16.msra.mxu0 0
        %1555 = vmatprep.subr.bf16.mxu0 0
        %1556 = vmatpush1.bf16.msra.mxu0 0
        %1557 = vmatprep.subr.bf16.mxu0 0
        %1558 = vmatpush1.bf16.msra.mxu0 0
        %1559 = vmatprep.subr.bf16.mxu0 0
        %1560 = vmatpush1.bf16.msra.mxu0 0
        %1561 = vmatprep.subr.bf16.mxu0 0
        %1562 = vmatpush1.bf16.msra.mxu0 0
        %1563 = vmatprep.subr.bf16.mxu0 0
        %1564 = vmatpush1.bf16.msra.mxu0 0
        %1565 = vmatprep.subr.bf16.mxu0 0
        %1566 = vmatpush1.bf16.msra.mxu0 0
        %1567 = vmatprep.subr.bf16.mxu0 0
        %1568 = vmatpush1.bf16.msra.mxu0 0
        %1569 = vmatprep.subr.bf16.mxu0 0
        %1570 = vmatpush1.bf16.msra.mxu0 0
        %1571 = vmatprep.subr.bf16.mxu0 0
        %1572 = vmatpush1.bf16.msra.mxu0 0
        %1573 = vmatprep.subr.bf16.mxu0 0
        %1574 = vmatpush1.bf16.msra.mxu0 0
        %1575 = vmatprep.subr.bf16.mxu0 0
        %1576 = vmatpush1.bf16.msra.mxu0 0
        %1577 = vmatprep.subr.bf16.mxu0 0
        %1578 = vmatpush1.bf16.msra.mxu0 0
        %1579 = vmatprep.mubr.bf16.mxu0 0
        %1580 = vmatmul.mubr.bf16.gmra.mrb[0].mxu0 %v1521
        %v1581 = vpop.f32.mrb[0].mxu0
        %v1582 = vadd.f32 0.0, %v1581
        %v1583 = vpop.f32.mrb[0].mxu0
        %v1584 = vpop.f32.mrb[0].mxu0
        %v1585 = vadd.f32 0.0, %v1584
        %v1586 = vpop.f32.mrb[0].mxu0
        %1587 = vmatprep.mubr.bf16.mxu0 0
        %1588 = vmatmul.mubr.bf16.gmra.mrb[0].mxu0 %v1524
        %v1589 = vpop.f32.mrb[0].mxu0
        %v1590 = vadd.f32 0.0, %v1589
        %v1591 = vpop.f32.mrb[0].mxu0
        %v1592 = vpop.f32.mrb[0].mxu0
        %v1593 = vadd.f32 0.0, %v1592
        %v1594 = vpop.f32.mrb[0].mxu0
        %1595 = vmatprep.mubr.bf16.mxu0 0
        %1596 = vmatmul.mubr.bf16.gmra.mrb[0].mxu0 %v1527
        %v1597 = vpop.f32.mrb[0].mxu0
        %v1598 = vadd.f32 0.0, %v1597
        %v1599 = vpop.f32.mrb[0].mxu0
        %v1600 = vpop.f32.mrb[0].mxu0
        %v1601 = vadd.f32 0.0, %v1600
        %v1602 = vpop.f32.mrb[0].mxu0
        %1603 = vmatprep.mubr.bf16.mxu0 0
        %1604 = vmatmul.mubr.bf16.gmra.mrb[0].mxu0 %v1530
        %v1605 = vpop.f32.mrb[0].mxu0
        %v1606 = vadd.f32 0.0, %v1605
        %v1607 = vpop.f32.mrb[0].mxu0
        %v1608 = vpop.f32.mrb[0].mxu0
        %v1609 = vadd.f32 0.0, %v1608
        %v1610 = vpop.f32.mrb[0].mxu0
        %1611 = vmatprep.mubr.bf16.mxu0 0
        %1612 = vmatmul.mubr.bf16.gmra.mrb[0].mxu0 %v1533
        %v1613 = vpop.f32.mrb[0].mxu0
        %v1614 = vadd.f32 0.0, %v1613
        %v1615 = vpop.f32.mrb[0].mxu0
        %v1616 = vpop.f32.mrb[0].mxu0
        %v1617 = vadd.f32 0.0, %v1616
        %v1618 = vpop.f32.mrb[0].mxu0
        %1619 = vmatprep.mubr.bf16.mxu0 0
        %1620 = vmatmul.mubr.bf16.gmra.mrb[0].mxu0 %v1536
        %v1621 = vpop.f32.mrb[0].mxu0
        %v1622 = vadd.f32 0.0, %v1621
        %v1623 = vpop.f32.mrb[0].mxu0
        %v1624 = vpop.f32.mrb[0].mxu0
        %v1625 = vadd.f32 0.0, %v1624
        %v1626 = vpop.f32.mrb[0].mxu0
        %1627 = vmatprep.mubr.bf16.mxu0 0
        %1628 = vmatmul.mubr.bf16.gmra.mrb[0].mxu0 %v1539
        %v1629 = vpop.f32.mrb[0].mxu0
        %v1630 = vadd.f32 0.0, %v1629
        %v1631 = vpop.f32.mrb[0].mxu0
        %v1632 = vpop.f32.mrb[0].mxu0
        %v1633 = vadd.f32 0.0, %v1632
        %v1634 = vpop.f32.mrb[0].mxu0
        %1635 = vmatprep.mubr.bf16.mxu0 0
        %1636 = vmatmul.mubr.bf16.gmra.mrb[0].mxu0 %v1542
        %v1637 = vpop.f32.mrb[0].mxu0
        %v1638 = vadd.f32 0.0, %v1637
        %v1639 = vpop.f32.mrb[0].mxu0
        %v1640 = vpop.f32.mrb[0].mxu0
        %v1641 = vadd.f32 0.0, %v1640
        %v1642 = vpop.f32.mrb[0].mxu0
        %1643 = vdwg.mxu0
        %v1644 = vadd.f32 %v1478, %v1582
        %v1645 = vadd.f32 %v1479, %v1585
        %v1646 = vadd.f32 %v1480, %v1590
        %v1647 = vadd.f32 %v1481, %v1593
        %v1648 = vadd.f32 %v1482, %v1598
        %v1649 = vadd.f32 %v1483, %v1601
        %v1650 = vadd.f32 %v1484, %v1606
        %v1651 = vadd.f32 %v1485, %v1609
        %v1652 = vadd.f32 %v1486, %v1614
        %v1653 = vadd.f32 %v1487, %v1617
        %v1654 = vadd.f32 %v1488, %v1622
        %v1655 = vadd.f32 %v1489, %v1625
        %v1656 = vadd.f32 %v1490, %v1630
        %v1657 = vadd.f32 %v1491, %v1633
        %v1658 = vadd.f32 %v1492, %v1638
        %v1659 = vadd.f32 %v1493, %v1641
        %v1660 = vld [vmem:[%s2] sm:$0x1]
        %v1662 = vlaneseq
        %v1663 = vshrl.u32 %v1662, 7
        %v1664 = vsub.s32 0, %v1663
        %v1665 = vrot.slane %v1660, %v1664
        %v1667 = vadd.f32 %v1644, %v1665
        %v1668 = vadd.f32 %v1645, %v1665
        %v1669 = vadd.f32 %v1646, %v1665
        %v1670 = vadd.f32 %v1647, %v1665
        %v1671 = vadd.f32 %v1648, %v1665
        %v1672 = vadd.f32 %v1649, %v1665
        %v1673 = vadd.f32 %v1650, %v1665
        %v1674 = vadd.f32 %v1651, %v1665
        %v1675 = vadd.f32 %v1652, %v1665
        %v1676 = vadd.f32 %v1653, %v1665
        %v1677 = vadd.f32 %v1654, %v1665
        %v1678 = vadd.f32 %v1655, %v1665
        %v1679 = vadd.f32 %v1656, %v1665
        %v1680 = vadd.f32 %v1657, %v1665
        %v1681 = vadd.f32 %v1658, %v1665
        %v1682 = vadd.f32 %v1659, %v1665
        %v1683 = vmax.f32 %v1667, 0.0
        %v1684 = vmax.f32 %v1668, 0.0
        %v1685 = vmax.f32 %v1669, 0.0
        %v1686 = vmax.f32 %v1670, 0.0
        %v1687 = vmax.f32 %v1671, 0.0
        %v1688 = vmax.f32 %v1672, 0.0
        %v1689 = vmax.f32 %v1673, 0.0
        %v1690 = vmax.f32 %v1674, 0.0
        %v1691 = vmax.f32 %v1675, 0.0
        %v1692 = vmax.f32 %v1676, 0.0
        %v1693 = vmax.f32 %v1677, 0.0
        %v1694 = vmax.f32 %v1678, 0.0
        %v1695 = vmax.f32 %v1679, 0.0
        %v1696 = vmax.f32 %v1680, 0.0
        %v1697 = vmax.f32 %v1681, 0.0
        %v1698 = vmax.f32 %v1682, 0.0
        %vm1699 = vcmask 523264
        %1700 = vst.msk [vmem:[%s177] sm:$0xff] %vm1699, %v1683
        %1701 = vst.msk [vmem:[%s177 + $0x8] sm:$0xff] %vm1699, %v1684
        %1702 = vst.msk [vmem:[%s177 + $0x10] sm:$0xff] %vm1699, %v1685
        %1703 = vst.msk [vmem:[%s177 + $0x18] sm:$0xff] %vm1699, %v1686
        %1704 = vst.msk [vmem:[%s177 + $0x20] sm:$0xff] %vm1699, %v1687
        %1705 = vst.msk [vmem:[%s177 + $0x28] sm:$0xff] %vm1699, %v1688
        %1706 = vst.msk [vmem:[%s177 + $0x30] sm:$0xff] %vm1699, %v1689
        %1707 = vst.msk [vmem:[%s177 + $0x38] sm:$0xff] %vm1699, %v1690
        %1708 = vst.msk [vmem:[%s177 + $0x40] sm:$0xff] %vm1699, %v1691
        %1709 = vst.msk [vmem:[%s177 + $0x48] sm:$0xff] %vm1699, %v1692
        %1710 = vst.msk [vmem:[%s177 + $0x50] sm:$0xff] %vm1699, %v1693
        %1711 = vst.msk [vmem:[%s177 + $0x58] sm:$0xff] %vm1699, %v1694
        %1712 = vst.msk [vmem:[%s177 + $0x60] sm:$0xff] %vm1699, %v1695
        %1713 = vst.msk [vmem:[%s177 + $0x68] sm:$0xff] %vm1699, %v1696
        %1714 = vst.msk [vmem:[%s177 + $0x70] sm:$0xff] %vm1699, %v1697
        %1715 = vst.msk [vmem:[%s177 + $0x78] sm:$0xff] %vm1699, %v1698
        %s1716 = sand.u32 %s107, 1
        %s1717 = scalar_lea.sflag [#allocation3], %s1716
        %s1718 = sand.u32 %s107, 1
        %s1719 = smul.addr %s1718, 128
        %s1720 = scalar_lea.vmem [#allocation2], %s1719
        // Predicated region
        $region33: #{tpu_custom_call.1} parent=31 // pred_check
          %p1721 = pneg %p117
        $region34: #{tpu_custom_call.1} parent=31 // pred_check_branch
          %1723 = sbr.rel (%p1721) target = $region36
        $region35: #{tpu_custom_call.1} parent=31 // pred_region
          %s1724 = smul.u32 8, %s22
          %s1726 = ssub.s32 2048, 2048
          %1727 = vsyncadd %s1717, %s1726
          %s1728 = smul.addr %s1724, 2
          %s1729 = smul.addr %s21, 32
          %s1730 = sadd.s32 %s1728, %s1729
          %s1731 = smul.addr %s1730, 128
          %s1732 = scalar_lea.hbm %s3, %s1731
          %s1733 = sshll.u32 %s1720, 4
          %s1734 = int_to_ptr.vmem [resolvable:$true] %s1733
          %1739 = dma.vmem_to_hbm [thread:$0]  %s1734, 2048, %s1732, %s1717, 128, 128, 8
        $region36: #{tpu_custom_call.1} parent=31 // pred_fallthru
          _
      $region32: #{tpu_custom_call.1} parent=5 // pred_fallthru
        _
      %p1740 = scmp.le.s32.totalorder 2, %s12
      // Predicated region
      $region37: #{tpu_custom_call.1} parent=5 // pred_check
        %p1741 = pneg %p1740
      $region38: #{tpu_custom_call.1} parent=5 // pred_check_branch
        %1743 = sbr.rel (%p1741) target = $region40
      $region39: #{tpu_custom_call.1} parent=5 // pred_region
        %s1744 = ssub.s32 %s12, 2
        // Predicated region
        $region41: #{tpu_custom_call.1} parent=39 // pred_check
          %p1745 = pneg %p123
        $region42: #{tpu_custom_call.1} parent=39 // pred_check_branch
          %1747 = sbr.rel (%p1745) target = $region44
        $region43: #{tpu_custom_call.1} parent=39 // pred_region
          %s1748 = sand.u32 %s108, 1
          %s1749 = scalar_lea.sflag [#allocation3], %s1748
          %s1750 = sand.u32 %s108, 1
          %s1751 = smul.addr %s1750, 128
          %s1752 = scalar_lea.vmem [#allocation2], %s1751
          %1753 = dma.done %s1749, 2048
        $region44: #{tpu_custom_call.1} parent=39 // pred_fallthru
          _
      $region40: #{tpu_custom_call.1} parent=5 // pred_fallthru
        _
    $region6: #{tpu_custom_call.1} parent=1 // loop_footer
      %s16 = sadd.s32 1, %s12
    $region7: #{tpu_custom_call.1} parent=1 // loop_footer_branch
      %11 = sbr.rel target = $region3
    $region8: #{tpu_custom_call.1} parent=1 // loop_exit
      _
    %1754 = vsyncpa [#allocation3], 1
    %s1755 = scalar_lea.sflag [#allocation3], 1
    %1756 = vsyncpa %s1755, 1

</llo_original>
